<compile_context>
chip_gen: v7x
topology: tpu7x:2x2x1
jax: 0.10.0
libtpu: 0.0.40
codegen_flags: <defaults>
</compile_context>

<pallas_src>
import functools

import jax
import jax.numpy as jnp
from jax import lax
from jax.experimental import pallas as pl
from jax.experimental.pallas import tpu as pltpu


# ----------------------------------------------------------------------------
# Fused kernel: conv + bias + zero-pad + ReLU (+ 2x2 neighbour max for pooling)
# One batch *block* (bb elements stacked along sublanes) per grid step, in a
# channel-tiled (rows, c_out*w) layout so every FMA uses all 128 lanes.
# ----------------------------------------------------------------------------
def _basic_block_kernel(x_ref, w_ref, b_ref, m_ref, o_ref, *,
                        c_in, k, rows, lanes, pad, pooling, n_acc=4):
    """
    x_ref : (1, c_in, rows, lanes)  input, pre-tiled across c_out on lanes
    w_ref : (c_in*k*k, lanes)       per-tap weight, repeated over each w-block
    b_ref : (1, lanes)              bias, repeated over each w-block
    m_ref : (rows, lanes)           0/1 pad mask (also zeroes roll wrap-around)
    o_ref : (1, rows, lanes)        padded+ReLU map (pooling=False) or 2x2
                                    neighbour-max map (pooling=True; valid at
                                    even rows / even in-block lanes)
    """
    taps = c_in * k * k

    # ---- conv: one full-lane-width FMA per (ci, kh, kw) tap, 4 indep. chains
    accs = [None] * max(1, min(n_acc, taps))
    idx = 0
    for ci in range(c_in):
        xt = x_ref[0, ci]                                       # (rows, lanes)
        for kh in range(k):
            xkh = xt if kh == 0 else pltpu.roll(xt, shift=rows - kh, axis=0)
            for kw in range(k):
                sh = xkh if kw == 0 else pltpu.roll(xkh, shift=lanes - kw,
                                                    axis=1)
                tap = (ci * k + kh) * k + kw
                term = w_ref[pl.ds(tap, 1), :] * sh             # (rows, lanes)
                accs[idx] = term if accs[idx] is None else accs[idx] + term
                idx = (idx + 1) % len(accs)
    parts = [a for a in accs if a is not None]
    while len(parts) > 1:                                       # tree reduce
        nxt = [parts[i] + parts[i + 1] for i in range(0, len(parts) - 1, 2)]
        if len(parts) % 2:
            nxt.append(parts[-1])
        parts = nxt
    acc = parts[0]
    # acc[b*h + r, co*w + c] == conv[b, co, r, c] for r < h_out, c < w_out;
    # row/lane roll wrap-around (incl. across stacked batch elements) only ever
    # lands in the region zeroed by the mask below.

    # ---- compose zero-padding (roll into place) + bias + ReLU, masked -------
    if pad:
        acc = pltpu.roll(pltpu.roll(acc, shift=pad, axis=0), shift=pad, axis=1)
    y = m_ref[...] * jnp.maximum(acc + b_ref[...], 0.0)

    # ---- fused 2x2 max-pool neighbour max (stride-2 decimation in wrapper) --
    if pooling:
        y = jnp.maximum(y, pltpu.roll(y, shift=lanes - 1, axis=1))
        y = jnp.maximum(y, pltpu.roll(y, shift=rows - 1, axis=0))

    o_ref[0] = y                                                # 128-lane store


# ----------------------------------------------------------------------------
# Batch-block selection (per-generation grid sizing).
# ----------------------------------------------------------------------------
def _min_grid_steps():
    """>=2 parallel steps on chips with 2 TCs / megacore; 1 on single-TC chips."""
    try:
        kind = jax.devices()[0].device_kind.lower()
    except Exception:
        return 2  # safe fallback: keep >=2 parallel steps
    if any(t in kind for t in ("v5e", "v5 lite", "v5lite", "v6e", "v6 lite")):
        return 1  # single TensorCore: whole batch in one step is best
    return 2      # v7x (2 TCs/chip), v4/v5p megacore


def _pick_batch_block(n, h, min_steps, max_rows=512):
    best = 1
    for bb in range(1, n + 1):
        if n % bb or bb * h > max_rows:
            continue
        if (n // bb) < min(min_steps, n):
            continue
        best = bb
    return best


# ----------------------------------------------------------------------------
# BasicBlock forward wrapper (up_sample=False).  Parameters + relayout
# constants are precomputed once per input shape; the whole forward is one jit.
# ----------------------------------------------------------------------------
class BasicBlockPallas:

    def __init__(self, weight, bias, kernel_size, up_sample=False,
                 pooling=True, batch_block=None):
        if up_sample:
            # TODO(synk): nn.Upsample(scale_factor=2, mode='bilinear') branch is
            #             not implemented; only conv/pad/relu/pool paths covered.
            raise NotImplementedError("up_sample=True branch not implemented")
        k = int(kernel_size)
        if k % 2 != 1:
            raise NotImplementedError("even kernel_size not supported")
        self.weight = jnp.asarray(weight, jnp.float32)   # (c_out, c_in, k, k)
        self.bias = jnp.asarray(bias, jnp.float32)       # (c_out,)
        self.k = k
        self.pooling = pooling
        self.batch_block = batch_block
        self._fwd_cache = {}

    def __call__(self, x):
        key = (x.shape, str(x.dtype))
        fwd = self._fwd_cache.get(key)
        if fwd is None:
            fwd = self._build(x.shape)
            self._fwd_cache[key] = fwd
        return fwd(x)

    def _build(self, x_shape):
        n, c_in, h, w = x_shape
        c_out, c_in_w = self.weight.shape[0], self.weight.shape[1]
        assert c_in == c_in_w, "input channel mismatch"
        k, pooling = self.k, self.pooling
        pad = (k - 1) // 2
        h_out, w_out = h - k + 1, w - k + 1
        assert h_out > 0 and w_out > 0
        if pooling:
            assert h % 2 == 0 and w % 2 == 0, "pooling path needs even H, W"

        bb = self.batch_block or _pick_batch_block(n, h, _min_grid_steps())
        assert n % bb == 0, "batch must be divisible by the batch block"
        nb = n // bb
        rows, lanes, taps = bb * h, c_out * w, c_in * k * k

        # ---- one-time precompute (cached across calls via the closure) ------
        w_rep = jnp.repeat(
            self.weight.transpose(1, 2, 3, 0).reshape(taps, c_out), w, axis=1)
        b_rep = jnp.repeat(self.bias, w)[None, :]
        r_ok = (jnp.arange(h) >= pad) & (jnp.arange(h) < pad + h_out)
        c_ok = (jnp.arange(w) >= pad) & (jnp.arange(w) < pad + w_out)
        mask = jnp.tile((r_ok[:, None] & c_ok[None, :]).astype(jnp.float32),
                        (bb, c_out))                            # (rows, lanes)

        kern = functools.partial(_basic_block_kernel, c_in=c_in, k=k,
                                 rows=rows, lanes=lanes, pad=pad,
                                 pooling=pooling)
        call = pl.pallas_call(
            kern,
            out_shape=jax.ShapeDtypeStruct((nb, rows, lanes), jnp.float32),
            grid=(nb,),
            in_specs=[
                pl.BlockSpec((1, c_in, rows, lanes), lambda i: (i, 0, 0, 0)),
                pl.BlockSpec((taps, lanes), lambda i: (0, 0)),   # grid-const
                pl.BlockSpec((1, lanes), lambda i: (0, 0)),      # grid-const
                pl.BlockSpec((rows, lanes), lambda i: (0, 0)),   # grid-const
            ],
            out_specs=pl.BlockSpec((1, rows, lanes), lambda i: (i, 0, 0)),
            compiler_params=pltpu.CompilerParams(
                dimension_semantics=("parallel",)),
        )

        @jax.jit
        def fwd(x):
            xf = x.astype(jnp.float32)
            # lane-tile across c_out, then stack bb batch elements on sublanes
            xt = jnp.tile(xf, (1, 1, 1, c_out))                 # (n,c_in,h,lanes)
            xt = xt.reshape(nb, bb, c_in, h, lanes).transpose(0, 2, 1, 3, 4)
            xt = xt.reshape(nb, c_in, rows, lanes)
            y = call(xt, w_rep, b_rep, mask)                    # (nb,rows,lanes)
            y = y.reshape(n, h, c_out, w)
            if pooling:
                y = y[:, 0::2, :, 0::2]                         # 2x2 decimation
            return y.transpose(0, 2, 1, 3)                      # -> NCHW

        return fwd


# ----------------------------------------------------------------------------
# Pure-JAX reference for verification.
# ----------------------------------------------------------------------------
def basic_block_reference(x, weight, bias, kernel_size, pooling=True):
    pad = (kernel_size - 1) // 2
    y = lax.conv_general_dilated(
        x, weight, window_strides=(1, 1), padding="VALID",
        dimension_numbers=("NCHW", "OIHW", "NCHW"),
        precision=lax.Precision.HIGHEST)
    y = y + bias.reshape(1, -1, 1, 1)
    y = jnp.pad(y, ((0, 0), (0, 0), (pad, pad), (pad, pad)))
    y = jnp.maximum(y, 0.0)
    if pooling:
        y = lax.reduce_window(
            y, -jnp.inf, lax.max,
            window_dimensions=(1, 1, 2, 2),
            window_strides=(1, 1, 2, 2), padding="VALID")
    return y


if __name__ == "__main__":
    # Small shapes consistent with the module's forward.
    N, C_IN, C_OUT, K, H, W = 2, 4, 8, 3, 16, 16

    key = jax.random.PRNGKey(0)
    kw_, kb_, kx_ = jax.random.split(key, 3)
    fan_in = C_IN * K * K
    bound = float(1.0 / (fan_in ** 0.5))  # PyTorch-style uniform init range
    weight = jax.random.uniform(kw_, (C_OUT, C_IN, K, K), jnp.float32,
                                -bound, bound)
    bias = jax.random.uniform(kb_, (C_OUT,), jnp.float32, -bound, bound)
    x = jax.random.normal(kx_, (N, C_IN, H, W), jnp.float32)

    # Default path: conv + pad + relu + 2x2 max pool (batch block auto-picked).
    blk = BasicBlockPallas(weight, bias, K, pooling=True)
    out = jax.block_until_ready(blk(x))
    ref = basic_block_reference(x, weight, bias, K, pooling=True)
    assert out.shape == ref.shape == (N, C_OUT, H // 2, W // 2), out.shape
    assert jnp.allclose(out, ref, rtol=5e-4, atol=1e-5), (
        float(jnp.max(jnp.abs(out - ref))))

    # Whole-batch-in-one-step path (batch stacking along sublanes).
    blk_b2 = BasicBlockPallas(weight, bias, K, pooling=True, batch_block=2)
    out_b2 = jax.block_until_ready(blk_b2(x))
    assert jnp.allclose(out_b2, ref, rtol=5e-4, atol=1e-5), (
        float(jnp.max(jnp.abs(out_b2 - ref))))

    # pooling=False path.
    blk_np = BasicBlockPallas(weight, bias, K, pooling=False)
    out_np = jax.block_until_ready(blk_np(x))
    ref_np = basic_block_reference(x, weight, bias, K, pooling=False)
    assert out_np.shape == ref_np.shape == (N, C_OUT, H, W), out_np.shape
    assert jnp.allclose(out_np, ref_np, rtol=5e-4, atol=1e-5), (
        float(jnp.max(jnp.abs(out_np - ref_np))))

    print("KERNEL_OK")
</pallas_src>

<mosaic_0001>
module attributes {stable_mosaic.version = 11 : i64} {
  func.func @_basic_block_kernel(%arg0: i32, %arg1: memref<1x4x16x128xf32, #tpu.memory_space<vmem>>, %arg2: memref<36x128xf32, #tpu.memory_space<vmem>>, %arg3: memref<1x128xf32, #tpu.memory_space<vmem>>, %arg4: memref<16x128xf32, #tpu.memory_space<vmem>>, %arg5: memref<1x16x128xf32, #tpu.memory_space<vmem>>) attributes {dimension_semantics = [#tpu.dimension_semantics<parallel>], iteration_bounds = array<i64: 2>, scalar_prefetch = 0 : i64, scratch_operands = 0 : i64, tpu.core_type = #tpu.core_type<tc>, window_params = [{transform_indices = @transform_0, window_bounds = array<i64: 1, 4, 16, 128>}, {pipeline_mode = #tpu.pipeline_mode<synchronous>, transform_indices = @transform_1, window_bounds = array<i64: 36, 128>}, {pipeline_mode = #tpu.pipeline_mode<synchronous>, transform_indices = @transform_2, window_bounds = array<i64: 1, 128>}, {pipeline_mode = #tpu.pipeline_mode<synchronous>, transform_indices = @transform_3, window_bounds = array<i64: 16, 128>}, {transform_indices = @transform_4, window_bounds = array<i64: 1, 16, 128>}]} {
    %c0 = arith.constant 0 : index
    %c0_0 = arith.constant 0 : index
    %c0_1 = arith.constant 0 : index
    %c0_2 = arith.constant 0 : index
    %0 = vector.load %arg1[%c0, %c0_0, %c0_1, %c0_2] : memref<1x4x16x128xf32, #tpu.memory_space<vmem>>, vector<1x1x16x128xf32>
    %1 = vector.shape_cast %0 : vector<1x1x16x128xf32> to vector<16x128xf32>
    %c0_3 = arith.constant 0 : index
    %c0_4 = arith.constant 0 : index
    %2 = vector.load %arg2[%c0_3, %c0_4] : memref<36x128xf32, #tpu.memory_space<vmem>>, vector<1x128xf32>
    %3 = vector.broadcast %2 : vector<1x128xf32> to vector<16x128xf32>
    %4 = arith.mulf %3, %1 : vector<16x128xf32>
    %c127_i32 = arith.constant 127 : i32
    %5 = tpu.dynamic_rotate %1 by %c127_i32 dim 1 : vector<16x128xf32>, i32 -> vector<16x128xf32>
    %c1 = arith.constant 1 : index
    %c0_5 = arith.constant 0 : index
    %6 = vector.load %arg2[%c1, %c0_5] : memref<36x128xf32, #tpu.memory_space<vmem>>, vector<1x128xf32>
    %7 = vector.broadcast %6 : vector<1x128xf32> to vector<16x128xf32>
    %8 = arith.mulf %7, %5 : vector<16x128xf32>
    %c126_i32 = arith.constant 126 : i32
    %9 = tpu.dynamic_rotate %1 by %c126_i32 dim 1 : vector<16x128xf32>, i32 -> vector<16x128xf32>
    %c2 = arith.constant 2 : index
    %c0_6 = arith.constant 0 : index
    %10 = vector.load %arg2[%c2, %c0_6] : memref<36x128xf32, #tpu.memory_space<vmem>>, vector<1x128xf32>
    %11 = vector.broadcast %10 : vector<1x128xf32> to vector<16x128xf32>
    %12 = arith.mulf %11, %9 : vector<16x128xf32>
    %c15_i32 = arith.constant 15 : i32
    %13 = tpu.dynamic_rotate %1 by %c15_i32 dim 0 : vector<16x128xf32>, i32 -> vector<16x128xf32>
    %c3 = arith.constant 3 : index
    %c0_7 = arith.constant 0 : index
    %14 = vector.load %arg2[%c3, %c0_7] : memref<36x128xf32, #tpu.memory_space<vmem>>, vector<1x128xf32>
    %15 = vector.broadcast %14 : vector<1x128xf32> to vector<16x128xf32>
    %16 = arith.mulf %15, %13 : vector<16x128xf32>
    %c127_i32_8 = arith.constant 127 : i32
    %17 = tpu.dynamic_rotate %13 by %c127_i32_8 dim 1 : vector<16x128xf32>, i32 -> vector<16x128xf32>
    %c4 = arith.constant 4 : index
    %c0_9 = arith.constant 0 : index
    %18 = vector.load %arg2[%c4, %c0_9] : memref<36x128xf32, #tpu.memory_space<vmem>>, vector<1x128xf32>
    %19 = vector.broadcast %18 : vector<1x128xf32> to vector<16x128xf32>
    %20 = arith.mulf %19, %17 : vector<16x128xf32>
    %21 = arith.addf %4, %20 : vector<16x128xf32>
    %c126_i32_10 = arith.constant 126 : i32
    %22 = tpu.dynamic_rotate %13 by %c126_i32_10 dim 1 : vector<16x128xf32>, i32 -> vector<16x128xf32>
    %c5 = arith.constant 5 : index
    %c0_11 = arith.constant 0 : index
    %23 = vector.load %arg2[%c5, %c0_11] : memref<36x128xf32, #tpu.memory_space<vmem>>, vector<1x128xf32>
    %24 = vector.broadcast %23 : vector<1x128xf32> to vector<16x128xf32>
    %25 = arith.mulf %24, %22 : vector<16x128xf32>
    %26 = arith.addf %8, %25 : vector<16x128xf32>
    %c14_i32 = arith.constant 14 : i32
    %27 = tpu.dynamic_rotate %1 by %c14_i32 dim 0 : vector<16x128xf32>, i32 -> vector<16x128xf32>
    %c6 = arith.constant 6 : index
    %c0_12 = arith.constant 0 : index
    %28 = vector.load %arg2[%c6, %c0_12] : memref<36x128xf32, #tpu.memory_space<vmem>>, vector<1x128xf32>
    %29 = vector.broadcast %28 : vector<1x128xf32> to vector<16x128xf32>
    %30 = arith.mulf %29, %27 : vector<16x128xf32>
    %31 = arith.addf %12, %30 : vector<16x128xf32>
    %c127_i32_13 = arith.constant 127 : i32
    %32 = tpu.dynamic_rotate %27 by %c127_i32_13 dim 1 : vector<16x128xf32>, i32 -> vector<16x128xf32>
    %c7 = arith.constant 7 : index
    %c0_14 = arith.constant 0 : index
    %33 = vector.load %arg2[%c7, %c0_14] : memref<36x128xf32, #tpu.memory_space<vmem>>, vector<1x128xf32>
    %34 = vector.broadcast %33 : vector<1x128xf32> to vector<16x128xf32>
    %35 = arith.mulf %34, %32 : vector<16x128xf32>
    %36 = arith.addf %16, %35 : vector<16x128xf32>
    %c126_i32_15 = arith.constant 126 : i32
    %37 = tpu.dynamic_rotate %27 by %c126_i32_15 dim 1 : vector<16x128xf32>, i32 -> vector<16x128xf32>
    %c8 = arith.constant 8 : index
    %c0_16 = arith.constant 0 : index
    %38 = vector.load %arg2[%c8, %c0_16] : memref<36x128xf32, #tpu.memory_space<vmem>>, vector<1x128xf32>
    %39 = vector.broadcast %38 : vector<1x128xf32> to vector<16x128xf32>
    %40 = arith.mulf %39, %37 : vector<16x128xf32>
    %41 = arith.addf %21, %40 : vector<16x128xf32>
    %c0_17 = arith.constant 0 : index
    %c1_18 = arith.constant 1 : index
    %c0_19 = arith.constant 0 : index
    %c0_20 = arith.constant 0 : index
    %42 = vector.load %arg1[%c0_17, %c1_18, %c0_19, %c0_20] : memref<1x4x16x128xf32, #tpu.memory_space<vmem>>, vector<1x1x16x128xf32>
    %43 = vector.shape_cast %42 : vector<1x1x16x128xf32> to vector<16x128xf32>
    %c9 = arith.constant 9 : index
    %c0_21 = arith.constant 0 : index
    %44 = vector.load %arg2[%c9, %c0_21] : memref<36x128xf32, #tpu.memory_space<vmem>>, vector<1x128xf32>
    %45 = vector.broadcast %44 : vector<1x128xf32> to vector<16x128xf32>
    %46 = arith.mulf %45, %43 : vector<16x128xf32>
    %47 = arith.addf %26, %46 : vector<16x128xf32>
    %c127_i32_22 = arith.constant 127 : i32
    %48 = tpu.dynamic_rotate %43 by %c127_i32_22 dim 1 : vector<16x128xf32>, i32 -> vector<16x128xf32>
    %c10 = arith.constant 10 : index
    %c0_23 = arith.constant 0 : index
    %49 = vector.load %arg2[%c10, %c0_23] : memref<36x128xf32, #tpu.memory_space<vmem>>, vector<1x128xf32>
    %50 = vector.broadcast %49 : vector<1x128xf32> to vector<16x128xf32>
    %51 = arith.mulf %50, %48 : vector<16x128xf32>
    %52 = arith.addf %31, %51 : vector<16x128xf32>
    %c126_i32_24 = arith.constant 126 : i32
    %53 = tpu.dynamic_rotate %43 by %c126_i32_24 dim 1 : vector<16x128xf32>, i32 -> vector<16x128xf32>
    %c11 = arith.constant 11 : index
    %c0_25 = arith.constant 0 : index
    %54 = vector.load %arg2[%c11, %c0_25] : memref<36x128xf32, #tpu.memory_space<vmem>>, vector<1x128xf32>
    %55 = vector.broadcast %54 : vector<1x128xf32> to vector<16x128xf32>
    %56 = arith.mulf %55, %53 : vector<16x128xf32>
    %57 = arith.addf %36, %56 : vector<16x128xf32>
    %c15_i32_26 = arith.constant 15 : i32
    %58 = tpu.dynamic_rotate %43 by %c15_i32_26 dim 0 : vector<16x128xf32>, i32 -> vector<16x128xf32>
    %c12 = arith.constant 12 : index
    %c0_27 = arith.constant 0 : index
    %59 = vector.load %arg2[%c12, %c0_27] : memref<36x128xf32, #tpu.memory_space<vmem>>, vector<1x128xf32>
    %60 = vector.broadcast %59 : vector<1x128xf32> to vector<16x128xf32>
    %61 = arith.mulf %60, %58 : vector<16x128xf32>
    %62 = arith.addf %41, %61 : vector<16x128xf32>
    %c127_i32_28 = arith.constant 127 : i32
    %63 = tpu.dynamic_rotate %58 by %c127_i32_28 dim 1 : vector<16x128xf32>, i32 -> vector<16x128xf32>
    %c13 = arith.constant 13 : index
    %c0_29 = arith.constant 0 : index
    %64 = vector.load %arg2[%c13, %c0_29] : memref<36x128xf32, #tpu.memory_space<vmem>>, vector<1x128xf32>
    %65 = vector.broadcast %64 : vector<1x128xf32> to vector<16x128xf32>
    %66 = arith.mulf %65, %63 : vector<16x128xf32>
    %67 = arith.addf %47, %66 : vector<16x128xf32>
    %c126_i32_30 = arith.constant 126 : i32
    %68 = tpu.dynamic_rotate %58 by %c126_i32_30 dim 1 : vector<16x128xf32>, i32 -> vector<16x128xf32>
    %c14 = arith.constant 14 : index
    %c0_31 = arith.constant 0 : index
    %69 = vector.load %arg2[%c14, %c0_31] : memref<36x128xf32, #tpu.memory_space<vmem>>, vector<1x128xf32>
    %70 = vector.broadcast %69 : vector<1x128xf32> to vector<16x128xf32>
    %71 = arith.mulf %70, %68 : vector<16x128xf32>
    %72 = arith.addf %52, %71 : vector<16x128xf32>
    %c14_i32_32 = arith.constant 14 : i32
    %73 = tpu.dynamic_rotate %43 by %c14_i32_32 dim 0 : vector<16x128xf32>, i32 -> vector<16x128xf32>
    %c15 = arith.constant 15 : index
    %c0_33 = arith.constant 0 : index
    %74 = vector.load %arg2[%c15, %c0_33] : memref<36x128xf32, #tpu.memory_space<vmem>>, vector<1x128xf32>
    %75 = vector.broadcast %74 : vector<1x128xf32> to vector<16x128xf32>
    %76 = arith.mulf %75, %73 : vector<16x128xf32>
    %77 = arith.addf %57, %76 : vector<16x128xf32>
    %c127_i32_34 = arith.constant 127 : i32
    %78 = tpu.dynamic_rotate %73 by %c127_i32_34 dim 1 : vector<16x128xf32>, i32 -> vector<16x128xf32>
    %c16 = arith.constant 16 : index
    %c0_35 = arith.constant 0 : index
    %79 = vector.load %arg2[%c16, %c0_35] : memref<36x128xf32, #tpu.memory_space<vmem>>, vector<1x128xf32>
    %80 = vector.broadcast %79 : vector<1x128xf32> to vector<16x128xf32>
    %81 = arith.mulf %80, %78 : vector<16x128xf32>
    %82 = arith.addf %62, %81 : vector<16x128xf32>
    %c126_i32_36 = arith.constant 126 : i32
    %83 = tpu.dynamic_rotate %73 by %c126_i32_36 dim 1 : vector<16x128xf32>, i32 -> vector<16x128xf32>
    %c17 = arith.constant 17 : index
    %c0_37 = arith.constant 0 : index
    %84 = vector.load %arg2[%c17, %c0_37] : memref<36x128xf32, #tpu.memory_space<vmem>>, vector<1x128xf32>
    %85 = vector.broadcast %84 : vector<1x128xf32> to vector<16x128xf32>
    %86 = arith.mulf %85, %83 : vector<16x128xf32>
    %87 = arith.addf %67, %86 : vector<16x128xf32>
    %c0_38 = arith.constant 0 : index
    %c2_39 = arith.constant 2 : index
    %c0_40 = arith.constant 0 : index
    %c0_41 = arith.constant 0 : index
    %88 = vector.load %arg1[%c0_38, %c2_39, %c0_40, %c0_41] : memref<1x4x16x128xf32, #tpu.memory_space<vmem>>, vector<1x1x16x128xf32>
    %89 = vector.shape_cast %88 : vector<1x1x16x128xf32> to vector<16x128xf32>
    %c18 = arith.constant 18 : index
    %c0_42 = arith.constant 0 : index
    %90 = vector.load %arg2[%c18, %c0_42] : memref<36x128xf32, #tpu.memory_space<vmem>>, vector<1x128xf32>
    %91 = vector.broadcast %90 : vector<1x128xf32> to vector<16x128xf32>
    %92 = arith.mulf %91, %89 : vector<16x128xf32>
    %93 = arith.addf %72, %92 : vector<16x128xf32>
    %c127_i32_43 = arith.constant 127 : i32
    %94 = tpu.dynamic_rotate %89 by %c127_i32_43 dim 1 : vector<16x128xf32>, i32 -> vector<16x128xf32>
    %c19 = arith.constant 19 : index
    %c0_44 = arith.constant 0 : index
    %95 = vector.load %arg2[%c19, %c0_44] : memref<36x128xf32, #tpu.memory_space<vmem>>, vector<1x128xf32>
    %96 = vector.broadcast %95 : vector<1x128xf32> to vector<16x128xf32>
    %97 = arith.mulf %96, %94 : vector<16x128xf32>
    %98 = arith.addf %77, %97 : vector<16x128xf32>
    %c126_i32_45 = arith.constant 126 : i32
    %99 = tpu.dynamic_rotate %89 by %c126_i32_45 dim 1 : vector<16x128xf32>, i32 -> vector<16x128xf32>
    %c20 = arith.constant 20 : index
    %c0_46 = arith.constant 0 : index
    %100 = vector.load %arg2[%c20, %c0_46] : memref<36x128xf32, #tpu.memory_space<vmem>>, vector<1x128xf32>
    %101 = vector.broadcast %100 : vector<1x128xf32> to vector<16x128xf32>
    %102 = arith.mulf %101, %99 : vector<16x128xf32>
    %103 = arith.addf %82, %102 : vector<16x128xf32>
    %c15_i32_47 = arith.constant 15 : i32
    %104 = tpu.dynamic_rotate %89 by %c15_i32_47 dim 0 : vector<16x128xf32>, i32 -> vector<16x128xf32>
    %c21 = arith.constant 21 : index
    %c0_48 = arith.constant 0 : index
    %105 = vector.load %arg2[%c21, %c0_48] : memref<36x128xf32, #tpu.memory_space<vmem>>, vector<1x128xf32>
    %106 = vector.broadcast %105 : vector<1x128xf32> to vector<16x128xf32>
    %107 = arith.mulf %106, %104 : vector<16x128xf32>
    %108 = arith.addf %87, %107 : vector<16x128xf32>
    %c127_i32_49 = arith.constant 127 : i32
    %109 = tpu.dynamic_rotate %104 by %c127_i32_49 dim 1 : vector<16x128xf32>, i32 -> vector<16x128xf32>
    %c22 = arith.constant 22 : index
    %c0_50 = arith.constant 0 : index
    %110 = vector.load %arg2[%c22, %c0_50] : memref<36x128xf32, #tpu.memory_space<vmem>>, vector<1x128xf32>
    %111 = vector.broadcast %110 : vector<1x128xf32> to vector<16x128xf32>
    %112 = arith.mulf %111, %109 : vector<16x128xf32>
    %113 = arith.addf %93, %112 : vector<16x128xf32>
    %c126_i32_51 = arith.constant 126 : i32
    %114 = tpu.dynamic_rotate %104 by %c126_i32_51 dim 1 : vector<16x128xf32>, i32 -> vector<16x128xf32>
    %c23 = arith.constant 23 : index
    %c0_52 = arith.constant 0 : index
    %115 = vector.load %arg2[%c23, %c0_52] : memref<36x128xf32, #tpu.memory_space<vmem>>, vector<1x128xf32>
    %116 = vector.broadcast %115 : vector<1x128xf32> to vector<16x128xf32>
    %117 = arith.mulf %116, %114 : vector<16x128xf32>
    %118 = arith.addf %98, %117 : vector<16x128xf32>
    %c14_i32_53 = arith.constant 14 : i32
    %119 = tpu.dynamic_rotate %89 by %c14_i32_53 dim 0 : vector<16x128xf32>, i32 -> vector<16x128xf32>
    %c24 = arith.constant 24 : index
    %c0_54 = arith.constant 0 : index
    %120 = vector.load %arg2[%c24, %c0_54] : memref<36x128xf32, #tpu.memory_space<vmem>>, vector<1x128xf32>
    %121 = vector.broadcast %120 : vector<1x128xf32> to vector<16x128xf32>
    %122 = arith.mulf %121, %119 : vector<16x128xf32>
    %123 = arith.addf %103, %122 : vector<16x128xf32>
    %c127_i32_55 = arith.constant 127 : i32
    %124 = tpu.dynamic_rotate %119 by %c127_i32_55 dim 1 : vector<16x128xf32>, i32 -> vector<16x128xf32>
    %c25 = arith.constant 25 : index
    %c0_56 = arith.constant 0 : index
    %125 = vector.load %arg2[%c25, %c0_56] : memref<36x128xf32, #tpu.memory_space<vmem>>, vector<1x128xf32>
    %126 = vector.broadcast %125 : vector<1x128xf32> to vector<16x128xf32>
    %127 = arith.mulf %126, %124 : vector<16x128xf32>
    %128 = arith.addf %108, %127 : vector<16x128xf32>
    %c126_i32_57 = arith.constant 126 : i32
    %129 = tpu.dynamic_rotate %119 by %c126_i32_57 dim 1 : vector<16x128xf32>, i32 -> vector<16x128xf32>
    %c26 = arith.constant 26 : index
    %c0_58 = arith.constant 0 : index
    %130 = vector.load %arg2[%c26, %c0_58] : memref<36x128xf32, #tpu.memory_space<vmem>>, vector<1x128xf32>
    %131 = vector.broadcast %130 : vector<1x128xf32> to vector<16x128xf32>
    %132 = arith.mulf %131, %129 : vector<16x128xf32>
    %133 = arith.addf %113, %132 : vector<16x128xf32>
    %c0_59 = arith.constant 0 : index
    %c3_60 = arith.constant 3 : index
    %c0_61 = arith.constant 0 : index
    %c0_62 = arith.constant 0 : index
    %134 = vector.load %arg1[%c0_59, %c3_60, %c0_61, %c0_62] : memref<1x4x16x128xf32, #tpu.memory_space<vmem>>, vector<1x1x16x128xf32>
    %135 = vector.shape_cast %134 : vector<1x1x16x128xf32> to vector<16x128xf32>
    %c27 = arith.constant 27 : index
    %c0_63 = arith.constant 0 : index
    %136 = vector.load %arg2[%c27, %c0_63] : memref<36x128xf32, #tpu.memory_space<vmem>>, vector<1x128xf32>
    %137 = vector.broadcast %136 : vector<1x128xf32> to vector<16x128xf32>
    %138 = arith.mulf %137, %135 : vector<16x128xf32>
    %139 = arith.addf %118, %138 : vector<16x128xf32>
    %c127_i32_64 = arith.constant 127 : i32
    %140 = tpu.dynamic_rotate %135 by %c127_i32_64 dim 1 : vector<16x128xf32>, i32 -> vector<16x128xf32>
    %c28 = arith.constant 28 : index
    %c0_65 = arith.constant 0 : index
    %141 = vector.load %arg2[%c28, %c0_65] : memref<36x128xf32, #tpu.memory_space<vmem>>, vector<1x128xf32>
    %142 = vector.broadcast %141 : vector<1x128xf32> to vector<16x128xf32>
    %143 = arith.mulf %142, %140 : vector<16x128xf32>
    %144 = arith.addf %123, %143 : vector<16x128xf32>
    %c126_i32_66 = arith.constant 126 : i32
    %145 = tpu.dynamic_rotate %135 by %c126_i32_66 dim 1 : vector<16x128xf32>, i32 -> vector<16x128xf32>
    %c29 = arith.constant 29 : index
    %c0_67 = arith.constant 0 : index
    %146 = vector.load %arg2[%c29, %c0_67] : memref<36x128xf32, #tpu.memory_space<vmem>>, vector<1x128xf32>
    %147 = vector.broadcast %146 : vector<1x128xf32> to vector<16x128xf32>
    %148 = arith.mulf %147, %145 : vector<16x128xf32>
    %149 = arith.addf %128, %148 : vector<16x128xf32>
    %c15_i32_68 = arith.constant 15 : i32
    %150 = tpu.dynamic_rotate %135 by %c15_i32_68 dim 0 : vector<16x128xf32>, i32 -> vector<16x128xf32>
    %c30 = arith.constant 30 : index
    %c0_69 = arith.constant 0 : index
    %151 = vector.load %arg2[%c30, %c0_69] : memref<36x128xf32, #tpu.memory_space<vmem>>, vector<1x128xf32>
    %152 = vector.broadcast %151 : vector<1x128xf32> to vector<16x128xf32>
    %153 = arith.mulf %152, %150 : vector<16x128xf32>
    %154 = arith.addf %133, %153 : vector<16x128xf32>
    %c127_i32_70 = arith.constant 127 : i32
    %155 = tpu.dynamic_rotate %150 by %c127_i32_70 dim 1 : vector<16x128xf32>, i32 -> vector<16x128xf32>
    %c31 = arith.constant 31 : index
    %c0_71 = arith.constant 0 : index
    %156 = vector.load %arg2[%c31, %c0_71] : memref<36x128xf32, #tpu.memory_space<vmem>>, vector<1x128xf32>
    %157 = vector.broadcast %156 : vector<1x128xf32> to vector<16x128xf32>
    %158 = arith.mulf %157, %155 : vector<16x128xf32>
    %159 = arith.addf %139, %158 : vector<16x128xf32>
    %c126_i32_72 = arith.constant 126 : i32
    %160 = tpu.dynamic_rotate %150 by %c126_i32_72 dim 1 : vector<16x128xf32>, i32 -> vector<16x128xf32>
    %c32 = arith.constant 32 : index
    %c0_73 = arith.constant 0 : index
    %161 = vector.load %arg2[%c32, %c0_73] : memref<36x128xf32, #tpu.memory_space<vmem>>, vector<1x128xf32>
    %162 = vector.broadcast %161 : vector<1x128xf32> to vector<16x128xf32>
    %163 = arith.mulf %162, %160 : vector<16x128xf32>
    %164 = arith.addf %144, %163 : vector<16x128xf32>
    %c14_i32_74 = arith.constant 14 : i32
    %165 = tpu.dynamic_rotate %135 by %c14_i32_74 dim 0 : vector<16x128xf32>, i32 -> vector<16x128xf32>
    %c33 = arith.constant 33 : index
    %c0_75 = arith.constant 0 : index
    %166 = vector.load %arg2[%c33, %c0_75] : memref<36x128xf32, #tpu.memory_space<vmem>>, vector<1x128xf32>
    %167 = vector.broadcast %166 : vector<1x128xf32> to vector<16x128xf32>
    %168 = arith.mulf %167, %165 : vector<16x128xf32>
    %169 = arith.addf %149, %168 : vector<16x128xf32>
    %c127_i32_76 = arith.constant 127 : i32
    %170 = tpu.dynamic_rotate %165 by %c127_i32_76 dim 1 : vector<16x128xf32>, i32 -> vector<16x128xf32>
    %c34 = arith.constant 34 : index
    %c0_77 = arith.constant 0 : index
    %171 = vector.load %arg2[%c34, %c0_77] : memref<36x128xf32, #tpu.memory_space<vmem>>, vector<1x128xf32>
    %172 = vector.broadcast %171 : vector<1x128xf32> to vector<16x128xf32>
    %173 = arith.mulf %172, %170 : vector<16x128xf32>
    %174 = arith.addf %154, %173 : vector<16x128xf32>
    %c126_i32_78 = arith.constant 126 : i32
    %175 = tpu.dynamic_rotate %165 by %c126_i32_78 dim 1 : vector<16x128xf32>, i32 -> vector<16x128xf32>
    %c35 = arith.constant 35 : index
    %c0_79 = arith.constant 0 : index
    %176 = vector.load %arg2[%c35, %c0_79] : memref<36x128xf32, #tpu.memory_space<vmem>>, vector<1x128xf32>
    %177 = vector.broadcast %176 : vector<1x128xf32> to vector<16x128xf32>
    %178 = arith.mulf %177, %175 : vector<16x128xf32>
    %179 = arith.addf %159, %178 : vector<16x128xf32>
    %180 = arith.addf %164, %169 : vector<16x128xf32>
    %181 = arith.addf %174, %179 : vector<16x128xf32>
    %182 = arith.addf %180, %181 : vector<16x128xf32>
    %c1_i32 = arith.constant 1 : i32
    %183 = tpu.dynamic_rotate %182 by %c1_i32 dim 0 : vector<16x128xf32>, i32 -> vector<16x128xf32>
    %c1_i32_80 = arith.constant 1 : i32
    %184 = tpu.dynamic_rotate %183 by %c1_i32_80 dim 1 : vector<16x128xf32>, i32 -> vector<16x128xf32>
    %c0_81 = arith.constant 0 : index
    %c0_82 = arith.constant 0 : index
    %185 = vector.load %arg4[%c0_81, %c0_82] : memref<16x128xf32, #tpu.memory_space<vmem>>, vector<16x128xf32>
    %c0_83 = arith.constant 0 : index
    %c0_84 = arith.constant 0 : index
    %186 = vector.load %arg3[%c0_83, %c0_84] : memref<1x128xf32, #tpu.memory_space<vmem>>, vector<1x128xf32>
    %187 = vector.broadcast %186 : vector<1x128xf32> to vector<16x128xf32>
    %188 = arith.addf %184, %187 : vector<16x128xf32>
    %cst = arith.constant 0.000000e+00 : f32
    %189 = vector.broadcast %cst : f32 to vector<16x128xf32>
    %190 = arith.maximumf %188, %189 : vector<16x128xf32>
    %191 = arith.mulf %185, %190 : vector<16x128xf32>
    %c127_i32_85 = arith.constant 127 : i32
    %192 = tpu.dynamic_rotate %191 by %c127_i32_85 dim 1 : vector<16x128xf32>, i32 -> vector<16x128xf32>
    %193 = arith.maximumf %191, %192 : vector<16x128xf32>
    %c15_i32_86 = arith.constant 15 : i32
    %194 = tpu.dynamic_rotate %193 by %c15_i32_86 dim 0 : vector<16x128xf32>, i32 -> vector<16x128xf32>
    %195 = arith.maximumf %193, %194 : vector<16x128xf32>
    %c0_87 = arith.constant 0 : index
    %c0_88 = arith.constant 0 : index
    %c0_89 = arith.constant 0 : index
    %196 = vector.load %arg5[%c0_87, %c0_88, %c0_89] : memref<1x16x128xf32, #tpu.memory_space<vmem>>, vector<1x16x128xf32>
    %197 = vector.shape_cast %196 : vector<1x16x128xf32> to vector<16x128xf32>
    %198 = vector.shape_cast %195 : vector<16x128xf32> to vector<1x16x128xf32>
    tpu.vector_store %arg5[%c0_87, %c0_88, %c0_89], %198 {strides = array<i32>} : memref<1x16x128xf32, #tpu.memory_space<vmem>>, vector<1x16x128xf32>,
    return
  }
  func.func @transform_0(%arg0: i32) -> (i32, i32, i32, i32) {
    %c0_i32 = arith.constant 0 : i32
    %c0_i32_0 = arith.constant 0 : i32
    %c0_i32_1 = arith.constant 0 : i32
    %c0_i32_2 = arith.constant 0 : i32
    return %arg0, %c0_i32, %c0_i32_0, %c0_i32_1 : i32, i32, i32, i32
  }
  func.func @transform_1(%arg0: i32) -> (i32, i32) {
    %c0_i32 = arith.constant 0 : i32
    %c0_i32_0 = arith.constant 0 : i32
    %c0_i32_1 = arith.constant 0 : i32
    return %c0_i32, %c0_i32_0 : i32, i32
  }
  func.func @transform_2(%arg0: i32) -> (i32, i32) {
    %c0_i32 = arith.constant 0 : i32
    %c0_i32_0 = arith.constant 0 : i32
    %c0_i32_1 = arith.constant 0 : i32
    return %c0_i32, %c0_i32_0 : i32, i32
  }
  func.func @transform_3(%arg0: i32) -> (i32, i32) {
    %c0_i32 = arith.constant 0 : i32
    %c0_i32_0 = arith.constant 0 : i32
    %c0_i32_1 = arith.constant 0 : i32
    return %c0_i32, %c0_i32_0 : i32, i32
  }
  func.func @transform_4(%arg0: i32) -> (i32, i32, i32) {
    %c0_i32 = arith.constant 0 : i32
    %c0_i32_0 = arith.constant 0 : i32
    %c0_i32_1 = arith.constant 0 : i32
    return %arg0, %c0_i32, %c0_i32_0 : i32, i32, i32
  }
}

</mosaic_0001>

<llo_original>
// kernel: tile.9
$region0: #{tile.9}
  %s0 = inlined_call_operand.vmem [shape: f32[2,4,16,8,16], index: 0, kind: input, shape index: {}]
  %s1 = inlined_call_operand.vmem [shape: f32[2,4,16,128], index: 1, kind: output, shape index: {}]
  %v2 = vld [vmem:[%s0] ss:$8 sm:$0xf]
  %v3 = vld [vmem:[%s0] ss:$8 sm:$0xf0]
  %vm4 = vcmask 1047556
  %v5 = vsel %vm4, %v3, %v2
  %vm6 = vcmask 130048
  %7 = vst.msk [vmem:[%s1] sm:$0xff] %vm6, %v5
  %s8 = scalar_lea.vmem %s0, 64
  %v9 = vld [vmem:[%s8] ss:$8 sm:$0xf]
  %s10 = scalar_lea.vmem %s0, 64
  %v11 = vld [vmem:[%s10] ss:$8 sm:$0xf0]
  %vm12 = vcmask 1047556
  %v13 = vsel %vm12, %v11, %v9
  %vm14 = vcmask 130048
  %s15 = scalar_lea.vmem %s1, 8
  %16 = vst.msk [vmem:[%s15] sm:$0xff] %vm14, %v13
  %s17 = scalar_lea.vmem %s0, 128
  %v18 = vld [vmem:[%s17] ss:$8 sm:$0xf]
  %s19 = scalar_lea.vmem %s0, 128
  %v20 = vld [vmem:[%s19] ss:$8 sm:$0xf0]
  %vm21 = vcmask 1047556
  %v22 = vsel %vm21, %v20, %v18
  %vm23 = vcmask 130048
  %s24 = scalar_lea.vmem %s1, 16
  %25 = vst.msk [vmem:[%s24] sm:$0xff] %vm23, %v22
  %s26 = scalar_lea.vmem %s0, 192
  %v27 = vld [vmem:[%s26] ss:$8 sm:$0xf]
  %s28 = scalar_lea.vmem %s0, 192
  %v29 = vld [vmem:[%s28] ss:$8 sm:$0xf0]
  %vm30 = vcmask 1047556
  %v31 = vsel %vm30, %v29, %v27
  %vm32 = vcmask 130048
  %s33 = scalar_lea.vmem %s1, 24
  %34 = vst.msk [vmem:[%s33] sm:$0xff] %vm32, %v31
  %s35 = scalar_lea.vmem %s0, 256
  %v36 = vld [vmem:[%s35] ss:$8 sm:$0xf]
  %s37 = scalar_lea.vmem %s0, 256
  %v38 = vld [vmem:[%s37] ss:$8 sm:$0xf0]
  %vm39 = vcmask 1047556
  %v40 = vsel %vm39, %v38, %v36
  %vm41 = vcmask 130048
  %s42 = scalar_lea.vmem %s1, 32
  %43 = vst.msk [vmem:[%s42] sm:$0xff] %vm41, %v40
  %s44 = scalar_lea.vmem %s0, 320
  %v45 = vld [vmem:[%s44] ss:$8 sm:$0xf]
  %s46 = scalar_lea.vmem %s0, 320
  %v47 = vld [vmem:[%s46] ss:$8 sm:$0xf0]
  %vm48 = vcmask 1047556
  %v49 = vsel %vm48, %v47, %v45
  %vm50 = vcmask 130048
  %s51 = scalar_lea.vmem %s1, 40
  %52 = vst.msk [vmem:[%s51] sm:$0xff] %vm50, %v49
  %s53 = scalar_lea.vmem %s0, 384
  %v54 = vld [vmem:[%s53] ss:$8 sm:$0xf]
  %s55 = scalar_lea.vmem %s0, 384
  %v56 = vld [vmem:[%s55] ss:$8 sm:$0xf0]
  %vm57 = vcmask 1047556
  %v58 = vsel %vm57, %v56, %v54
  %vm59 = vcmask 130048
  %s60 = scalar_lea.vmem %s1, 48
  %61 = vst.msk [vmem:[%s60] sm:$0xff] %vm59, %v58
  %s62 = scalar_lea.vmem %s0, 448
  %v63 = vld [vmem:[%s62] ss:$8 sm:$0xf]
  %s64 = scalar_lea.vmem %s0, 448
  %v65 = vld [vmem:[%s64] ss:$8 sm:$0xf0]
  %vm66 = vcmask 1047556
  %v67 = vsel %vm66, %v65, %v63
  %vm68 = vcmask 130048
  %s69 = scalar_lea.vmem %s1, 56
  %70 = vst.msk [vmem:[%s69] sm:$0xff] %vm68, %v67
  %s71 = scalar_lea.vmem %s0, 512
  %v72 = vld [vmem:[%s71] ss:$8 sm:$0xf]
  %s73 = scalar_lea.vmem %s0, 512
  %v74 = vld [vmem:[%s73] ss:$8 sm:$0xf0]
  %vm75 = vcmask 1047556
  %v76 = vsel %vm75, %v74, %v72
  %vm77 = vcmask 130048
  %s78 = scalar_lea.vmem %s1, 64
  %79 = vst.msk [vmem:[%s78] sm:$0xff] %vm77, %v76
  %s80 = scalar_lea.vmem %s0, 576
  %v81 = vld [vmem:[%s80] ss:$8 sm:$0xf]
  %s82 = scalar_lea.vmem %s0, 576
  %v83 = vld [vmem:[%s82] ss:$8 sm:$0xf0]
  %vm84 = vcmask 1047556
  %v85 = vsel %vm84, %v83, %v81
  %vm86 = vcmask 130048
  %s87 = scalar_lea.vmem %s1, 72
  %88 = vst.msk [vmem:[%s87] sm:$0xff] %vm86, %v85
  %s89 = scalar_lea.vmem %s0, 640
  %v90 = vld [vmem:[%s89] ss:$8 sm:$0xf]
  %s91 = scalar_lea.vmem %s0, 640
  %v92 = vld [vmem:[%s91] ss:$8 sm:$0xf0]
  %vm93 = vcmask 1047556
  %v94 = vsel %vm93, %v92, %v90
  %vm95 = vcmask 130048
  %s96 = scalar_lea.vmem %s1, 80
  %97 = vst.msk [vmem:[%s96] sm:$0xff] %vm95, %v94
  %s98 = scalar_lea.vmem %s0, 704
  %v99 = vld [vmem:[%s98] ss:$8 sm:$0xf]
  %s100 = scalar_lea.vmem %s0, 704
  %v101 = vld [vmem:[%s100] ss:$8 sm:$0xf0]
  %vm102 = vcmask 1047556
  %v103 = vsel %vm102, %v101, %v99
  %vm104 = vcmask 130048
  %s105 = scalar_lea.vmem %s1, 88
  %106 = vst.msk [vmem:[%s105] sm:$0xff] %vm104, %v103
  %s107 = scalar_lea.vmem %s0, 768
  %v108 = vld [vmem:[%s107] ss:$8 sm:$0xf]
  %s109 = scalar_lea.vmem %s0, 768
  %v110 = vld [vmem:[%s109] ss:$8 sm:$0xf0]
  %vm111 = vcmask 1047556
  %v112 = vsel %vm111, %v110, %v108
  %vm113 = vcmask 130048
  %s114 = scalar_lea.vmem %s1, 96
  %115 = vst.msk [vmem:[%s114] sm:$0xff] %vm113, %v112
  %s116 = scalar_lea.vmem %s0, 832
  %v117 = vld [vmem:[%s116] ss:$8 sm:$0xf]
  %s118 = scalar_lea.vmem %s0, 832
  %v119 = vld [vmem:[%s118] ss:$8 sm:$0xf0]
  %vm120 = vcmask 1047556
  %v121 = vsel %vm120, %v119, %v117
  %vm122 = vcmask 130048
  %s123 = scalar_lea.vmem %s1, 104
  %124 = vst.msk [vmem:[%s123] sm:$0xff] %vm122, %v121
  %s125 = scalar_lea.vmem %s0, 896
  %v126 = vld [vmem:[%s125] ss:$8 sm:$0xf]
  %s127 = scalar_lea.vmem %s0, 896
  %v128 = vld [vmem:[%s127] ss:$8 sm:$0xf0]
  %vm129 = vcmask 1047556
  %v130 = vsel %vm129, %v128, %v126
  %vm131 = vcmask 130048
  %s132 = scalar_lea.vmem %s1, 112
  %133 = vst.msk [vmem:[%s132] sm:$0xff] %vm131, %v130
  %s134 = scalar_lea.vmem %s0, 960
  %v135 = vld [vmem:[%s134] ss:$8 sm:$0xf]
  %s136 = scalar_lea.vmem %s0, 960
  %v137 = vld [vmem:[%s136] ss:$8 sm:$0xf0]
  %vm138 = vcmask 1047556
  %v139 = vsel %vm138, %v137, %v135
  %vm140 = vcmask 130048
  %s141 = scalar_lea.vmem %s1, 120
  %142 = vst.msk [vmem:[%s141] sm:$0xff] %vm140, %v139
  %s143 = scalar_lea.vmem %s0, 7
  %v144 = vld [vmem:[%s143] ss:$8 sm:$0xf]
  %s145 = scalar_lea.vmem %s0, 7
  %v146 = vld [vmem:[%s145] ss:$8 sm:$0xf0]
  %vm147 = vcmask 1047556
  %v148 = vsel %vm147, %v146, %v144
  %149 = vrot.lane.b32.xlu0 %v148, 112
  %v150 = vpop.permute.xlu0 %149
  %vm151 = vcmask 1048448
  %152 = vst.msk [vmem:[%s1] sm:$0xff] %vm151, %v150
  %s153 = scalar_lea.vmem %s0, 263
  %v154 = vld [vmem:[%s153] ss:$8 sm:$0xf]
  %s155 = scalar_lea.vmem %s0, 263
  %v156 = vld [vmem:[%s155] ss:$8 sm:$0xf0]
  %vm157 = vcmask 1047556
  %v158 = vsel %vm157, %v156, %v154
  %159 = vrot.lane.b32.xlu0 %v158, 112
  %v160 = vpop.permute.xlu0 %159
  %vm161 = vcmask 1048448
  %s162 = scalar_lea.vmem %s1, 32
  %163 = vst.msk [vmem:[%s162] sm:$0xff] %vm161, %v160
  %s164 = scalar_lea.vmem %s0, 519
  %v165 = vld [vmem:[%s164] ss:$8 sm:$0xf]
  %s166 = scalar_lea.vmem %s0, 519
  %v167 = vld [vmem:[%s166] ss:$8 sm:$0xf0]
  %vm168 = vcmask 1047556
  %v169 = vsel %vm168, %v167, %v165
  %170 = vrot.lane.b32.xlu0 %v169, 112
  %v171 = vpop.permute.xlu0 %170
  %vm172 = vcmask 1048448
  %s173 = scalar_lea.vmem %s1, 64
  %174 = vst.msk [vmem:[%s173] sm:$0xff] %vm172, %v171
  %s175 = scalar_lea.vmem %s0, 775
  %v176 = vld [vmem:[%s175] ss:$8 sm:$0xf]
  %s177 = scalar_lea.vmem %s0, 775
  %v178 = vld [vmem:[%s177] ss:$8 sm:$0xf0]
  %vm179 = vcmask 1047556
  %v180 = vsel %vm179, %v178, %v176
  %181 = vrot.lane.b32.xlu0 %v180, 112
  %v182 = vpop.permute.xlu0 %181
  %vm183 = vcmask 1048448
  %s184 = scalar_lea.vmem %s1, 96
  %185 = vst.msk [vmem:[%s184] sm:$0xff] %vm183, %v182
  %s186 = scalar_lea.vmem %s0, 71
  %v187 = vld [vmem:[%s186] ss:$8 sm:$0xf]
  %s188 = scalar_lea.vmem %s0, 71
  %v189 = vld [vmem:[%s188] ss:$8 sm:$0xf0]
  %vm190 = vcmask 1047556
  %v191 = vsel %vm190, %v189, %v187
  %192 = vrot.lane.b32.xlu0 %v191, 112
  %v193 = vpop.permute.xlu0 %192
  %vm194 = vcmask 1048448
  %s195 = scalar_lea.vmem %s1, 8
  %196 = vst.msk [vmem:[%s195] sm:$0xff] %vm194, %v193
  %s197 = scalar_lea.vmem %s0, 327
  %v198 = vld [vmem:[%s197] ss:$8 sm:$0xf]
  %s199 = scalar_lea.vmem %s0, 327
  %v200 = vld [vmem:[%s199] ss:$8 sm:$0xf0]
  %vm201 = vcmask 1047556
  %v202 = vsel %vm201, %v200, %v198
  %203 = vrot.lane.b32.xlu0 %v202, 112
  %v204 = vpop.permute.xlu0 %203
  %vm205 = vcmask 1048448
  %s206 = scalar_lea.vmem %s1, 40
  %207 = vst.msk [vmem:[%s206] sm:$0xff] %vm205, %v204
  %s208 = scalar_lea.vmem %s0, 583
  %v209 = vld [vmem:[%s208] ss:$8 sm:$0xf]
  %s210 = scalar_lea.vmem %s0, 583
  %v211 = vld [vmem:[%s210] ss:$8 sm:$0xf0]
  %vm212 = vcmask 1047556
  %v213 = vsel %vm212, %v211, %v209
  %214 = vrot.lane.b32.xlu0 %v213, 112
  %v215 = vpop.permute.xlu0 %214
  %vm216 = vcmask 1048448
  %s217 = scalar_lea.vmem %s1, 72
  %218 = vst.msk [vmem:[%s217] sm:$0xff] %vm216, %v215
  %s219 = scalar_lea.vmem %s0, 839
  %v220 = vld [vmem:[%s219] ss:$8 sm:$0xf]
  %s221 = scalar_lea.vmem %s0, 839
  %v222 = vld [vmem:[%s221] ss:$8 sm:$0xf0]
  %vm223 = vcmask 1047556
  %v224 = vsel %vm223, %v222, %v220
  %225 = vrot.lane.b32.xlu0 %v224, 112
  %v226 = vpop.permute.xlu0 %225
  %vm227 = vcmask 1048448
  %s228 = scalar_lea.vmem %s1, 104
  %229 = vst.msk [vmem:[%s228] sm:$0xff] %vm227, %v226
  %s230 = scalar_lea.vmem %s0, 135
  %v231 = vld [vmem:[%s230] ss:$8 sm:$0xf]
  %s232 = scalar_lea.vmem %s0, 135
  %v233 = vld [vmem:[%s232] ss:$8 sm:$0xf0]
  %vm234 = vcmask 1047556
  %v235 = vsel %vm234, %v233, %v231
  %236 = vrot.lane.b32.xlu0 %v235, 112
  %v237 = vpop.permute.xlu0 %236
  %vm238 = vcmask 1048448
  %s239 = scalar_lea.vmem %s1, 16
  %240 = vst.msk [vmem:[%s239] sm:$0xff] %vm238, %v237
  %s241 = scalar_lea.vmem %s0, 391
  %v242 = vld [vmem:[%s241] ss:$8 sm:$0xf]
  %s243 = scalar_lea.vmem %s0, 391
  %v244 = vld [vmem:[%s243] ss:$8 sm:$0xf0]
  %vm245 = vcmask 1047556
  %v246 = vsel %vm245, %v244, %v242
  %247 = vrot.lane.b32.xlu0 %v246, 112
  %v248 = vpop.permute.xlu0 %247
  %vm249 = vcmask 1048448
  %s250 = scalar_lea.vmem %s1, 48
  %251 = vst.msk [vmem:[%s250] sm:$0xff] %vm249, %v248
  %s252 = scalar_lea.vmem %s0, 647
  %v253 = vld [vmem:[%s252] ss:$8 sm:$0xf]
  %s254 = scalar_lea.vmem %s0, 647
  %v255 = vld [vmem:[%s254] ss:$8 sm:$0xf0]
  %vm256 = vcmask 1047556
  %v257 = vsel %vm256, %v255, %v253
  %258 = vrot.lane.b32.xlu0 %v257, 112
  %v259 = vpop.permute.xlu0 %258
  %vm260 = vcmask 1048448
  %s261 = scalar_lea.vmem %s1, 80
  %262 = vst.msk [vmem:[%s261] sm:$0xff] %vm260, %v259
  %s263 = scalar_lea.vmem %s0, 903
  %v264 = vld [vmem:[%s263] ss:$8 sm:$0xf]
  %s265 = scalar_lea.vmem %s0, 903
  %v266 = vld [vmem:[%s265] ss:$8 sm:$0xf0]
  %vm267 = vcmask 1047556
  %v268 = vsel %vm267, %v266, %v264
  %269 = vrot.lane.b32.xlu0 %v268, 112
  %v270 = vpop.permute.xlu0 %269
  %vm271 = vcmask 1048448
  %s272 = scalar_lea.vmem %s1, 112
  %273 = vst.msk [vmem:[%s272] sm:$0xff] %vm271, %v270
  %s274 = scalar_lea.vmem %s0, 199
  %v275 = vld [vmem:[%s274] ss:$8 sm:$0xf]
  %s276 = scalar_lea.vmem %s0, 199
  %v277 = vld [vmem:[%s276] ss:$8 sm:$0xf0]
  %vm278 = vcmask 1047556
  %v279 = vsel %vm278, %v277, %v275
  %280 = vrot.lane.b32.xlu0 %v279, 112
  %v281 = vpop.permute.xlu0 %280
  %vm282 = vcmask 1048448
  %s283 = scalar_lea.vmem %s1, 24
  %284 = vst.msk [vmem:[%s283] sm:$0xff] %vm282, %v281
  %s285 = scalar_lea.vmem %s0, 455
  %v286 = vld [vmem:[%s285] ss:$8 sm:$0xf]
  %s287 = scalar_lea.vmem %s0, 455
  %v288 = vld [vmem:[%s287] ss:$8 sm:$0xf0]
  %vm289 = vcmask 1047556
  %v290 = vsel %vm289, %v288, %v286
  %291 = vrot.lane.b32.xlu0 %v290, 112
  %v292 = vpop.permute.xlu0 %291
  %vm293 = vcmask 1048448
  %s294 = scalar_lea.vmem %s1, 56
  %295 = vst.msk [vmem:[%s294] sm:$0xff] %vm293, %v292
  %s296 = scalar_lea.vmem %s0, 711
  %v297 = vld [vmem:[%s296] ss:$8 sm:$0xf]
  %s298 = scalar_lea.vmem %s0, 711
  %v299 = vld [vmem:[%s298] ss:$8 sm:$0xf0]
  %vm300 = vcmask 1047556
  %v301 = vsel %vm300, %v299, %v297
  %302 = vrot.lane.b32.xlu0 %v301, 112
  %v303 = vpop.permute.xlu0 %302
  %vm304 = vcmask 1048448
  %s305 = scalar_lea.vmem %s1, 88
  %306 = vst.msk [vmem:[%s305] sm:$0xff] %vm304, %v303
  %s307 = scalar_lea.vmem %s0, 967
  %v308 = vld [vmem:[%s307] ss:$8 sm:$0xf]
  %s309 = scalar_lea.vmem %s0, 967
  %v310 = vld [vmem:[%s309] ss:$8 sm:$0xf0]
  %vm311 = vcmask 1047556
  %v312 = vsel %vm311, %v310, %v308
  %313 = vrot.lane.b32.xlu0 %v312, 112
  %v314 = vpop.permute.xlu0 %313
  %vm315 = vcmask 1048448
  %s316 = scalar_lea.vmem %s1, 120
  %317 = vst.msk [vmem:[%s316] sm:$0xff] %vm315, %v314
  %s318 = scalar_lea.vmem %s0, 6
  %v319 = vld [vmem:[%s318] ss:$8 sm:$0xf]
  %s320 = scalar_lea.vmem %s0, 6
  %v321 = vld [vmem:[%s320] ss:$8 sm:$0xf0]
  %vm322 = vcmask 1047556
  %v323 = vsel %vm322, %v321, %v319
  %324 = vrot.lane.b32.xlu0 %v323, 96
  %v325 = vpop.permute.xlu0 %324
  %vm326 = vcmask 917248
  %327 = vst.msk [vmem:[%s1] sm:$0xff] %vm326, %v325
  %s328 = scalar_lea.vmem %s0, 262
  %v329 = vld [vmem:[%s328] ss:$8 sm:$0xf]
  %s330 = scalar_lea.vmem %s0, 262
  %v331 = vld [vmem:[%s330] ss:$8 sm:$0xf0]
  %vm332 = vcmask 1047556
  %v333 = vsel %vm332, %v331, %v329
  %334 = vrot.lane.b32.xlu0 %v333, 96
  %v335 = vpop.permute.xlu0 %334
  %vm336 = vcmask 917248
  %s337 = scalar_lea.vmem %s1, 32
  %338 = vst.msk [vmem:[%s337] sm:$0xff] %vm336, %v335
  %s339 = scalar_lea.vmem %s0, 518
  %v340 = vld [vmem:[%s339] ss:$8 sm:$0xf]
  %s341 = scalar_lea.vmem %s0, 518
  %v342 = vld [vmem:[%s341] ss:$8 sm:$0xf0]
  %vm343 = vcmask 1047556
  %v344 = vsel %vm343, %v342, %v340
  %345 = vrot.lane.b32.xlu0 %v344, 96
  %v346 = vpop.permute.xlu0 %345
  %vm347 = vcmask 917248
  %s348 = scalar_lea.vmem %s1, 64
  %349 = vst.msk [vmem:[%s348] sm:$0xff] %vm347, %v346
  %s350 = scalar_lea.vmem %s0, 774
  %v351 = vld [vmem:[%s350] ss:$8 sm:$0xf]
  %s352 = scalar_lea.vmem %s0, 774
  %v353 = vld [vmem:[%s352] ss:$8 sm:$0xf0]
  %vm354 = vcmask 1047556
  %v355 = vsel %vm354, %v353, %v351
  %356 = vrot.lane.b32.xlu0 %v355, 96
  %v357 = vpop.permute.xlu0 %356
  %vm358 = vcmask 917248
  %s359 = scalar_lea.vmem %s1, 96
  %360 = vst.msk [vmem:[%s359] sm:$0xff] %vm358, %v357
  %s361 = scalar_lea.vmem %s0, 70
  %v362 = vld [vmem:[%s361] ss:$8 sm:$0xf]
  %s363 = scalar_lea.vmem %s0, 70
  %v364 = vld [vmem:[%s363] ss:$8 sm:$0xf0]
  %vm365 = vcmask 1047556
  %v366 = vsel %vm365, %v364, %v362
  %367 = vrot.lane.b32.xlu0 %v366, 96
  %v368 = vpop.permute.xlu0 %367
  %vm369 = vcmask 917248
  %s370 = scalar_lea.vmem %s1, 8
  %371 = vst.msk [vmem:[%s370] sm:$0xff] %vm369, %v368
  %s372 = scalar_lea.vmem %s0, 326
  %v373 = vld [vmem:[%s372] ss:$8 sm:$0xf]
  %s374 = scalar_lea.vmem %s0, 326
  %v375 = vld [vmem:[%s374] ss:$8 sm:$0xf0]
  %vm376 = vcmask 1047556
  %v377 = vsel %vm376, %v375, %v373
  %378 = vrot.lane.b32.xlu0 %v377, 96
  %v379 = vpop.permute.xlu0 %378
  %vm380 = vcmask 917248
  %s381 = scalar_lea.vmem %s1, 40
  %382 = vst.msk [vmem:[%s381] sm:$0xff] %vm380, %v379
  %s383 = scalar_lea.vmem %s0, 582
  %v384 = vld [vmem:[%s383] ss:$8 sm:$0xf]
  %s385 = scalar_lea.vmem %s0, 582
  %v386 = vld [vmem:[%s385] ss:$8 sm:$0xf0]
  %vm387 = vcmask 1047556
  %v388 = vsel %vm387, %v386, %v384
  %389 = vrot.lane.b32.xlu0 %v388, 96
  %v390 = vpop.permute.xlu0 %389
  %vm391 = vcmask 917248
  %s392 = scalar_lea.vmem %s1, 72
  %393 = vst.msk [vmem:[%s392] sm:$0xff] %vm391, %v390
  %s394 = scalar_lea.vmem %s0, 838
  %v395 = vld [vmem:[%s394] ss:$8 sm:$0xf]
  %s396 = scalar_lea.vmem %s0, 838
  %v397 = vld [vmem:[%s396] ss:$8 sm:$0xf0]
  %vm398 = vcmask 1047556
  %v399 = vsel %vm398, %v397, %v395
  %400 = vrot.lane.b32.xlu0 %v399, 96
  %v401 = vpop.permute.xlu0 %400
  %vm402 = vcmask 917248
  %s403 = scalar_lea.vmem %s1, 104
  %404 = vst.msk [vmem:[%s403] sm:$0xff] %vm402, %v401
  %s405 = scalar_lea.vmem %s0, 134
  %v406 = vld [vmem:[%s405] ss:$8 sm:$0xf]
  %s407 = scalar_lea.vmem %s0, 134
  %v408 = vld [vmem:[%s407] ss:$8 sm:$0xf0]
  %vm409 = vcmask 1047556
  %v410 = vsel %vm409, %v408, %v406
  %411 = vrot.lane.b32.xlu0 %v410, 96
  %v412 = vpop.permute.xlu0 %411
  %vm413 = vcmask 917248
  %s414 = scalar_lea.vmem %s1, 16
  %415 = vst.msk [vmem:[%s414] sm:$0xff] %vm413, %v412
  %s416 = scalar_lea.vmem %s0, 390
  %v417 = vld [vmem:[%s416] ss:$8 sm:$0xf]
  %s418 = scalar_lea.vmem %s0, 390
  %v419 = vld [vmem:[%s418] ss:$8 sm:$0xf0]
  %vm420 = vcmask 1047556
  %v421 = vsel %vm420, %v419, %v417
  %422 = vrot.lane.b32.xlu0 %v421, 96
  %v423 = vpop.permute.xlu0 %422
  %vm424 = vcmask 917248
  %s425 = scalar_lea.vmem %s1, 48
  %426 = vst.msk [vmem:[%s425] sm:$0xff] %vm424, %v423
  %s427 = scalar_lea.vmem %s0, 646
  %v428 = vld [vmem:[%s427] ss:$8 sm:$0xf]
  %s429 = scalar_lea.vmem %s0, 646
  %v430 = vld [vmem:[%s429] ss:$8 sm:$0xf0]
  %vm431 = vcmask 1047556
  %v432 = vsel %vm431, %v430, %v428
  %433 = vrot.lane.b32.xlu0 %v432, 96
  %v434 = vpop.permute.xlu0 %433
  %vm435 = vcmask 917248
  %s436 = scalar_lea.vmem %s1, 80
  %437 = vst.msk [vmem:[%s436] sm:$0xff] %vm435, %v434
  %s438 = scalar_lea.vmem %s0, 902
  %v439 = vld [vmem:[%s438] ss:$8 sm:$0xf]
  %s440 = scalar_lea.vmem %s0, 902
  %v441 = vld [vmem:[%s440] ss:$8 sm:$0xf0]
  %vm442 = vcmask 1047556
  %v443 = vsel %vm442, %v441, %v439
  %444 = vrot.lane.b32.xlu0 %v443, 96
  %v445 = vpop.permute.xlu0 %444
  %vm446 = vcmask 917248
  %s447 = scalar_lea.vmem %s1, 112
  %448 = vst.msk [vmem:[%s447] sm:$0xff] %vm446, %v445
  %s449 = scalar_lea.vmem %s0, 198
  %v450 = vld [vmem:[%s449] ss:$8 sm:$0xf]
  %s451 = scalar_lea.vmem %s0, 198
  %v452 = vld [vmem:[%s451] ss:$8 sm:$0xf0]
  %vm453 = vcmask 1047556
  %v454 = vsel %vm453, %v452, %v450
  %455 = vrot.lane.b32.xlu0 %v454, 96
  %v456 = vpop.permute.xlu0 %455
  %vm457 = vcmask 917248
  %s458 = scalar_lea.vmem %s1, 24
  %459 = vst.msk [vmem:[%s458] sm:$0xff] %vm457, %v456
  %s460 = scalar_lea.vmem %s0, 454
  %v461 = vld [vmem:[%s460] ss:$8 sm:$0xf]
  %s462 = scalar_lea.vmem %s0, 454
  %v463 = vld [vmem:[%s462] ss:$8 sm:$0xf0]
  %vm464 = vcmask 1047556
  %v465 = vsel %vm464, %v463, %v461
  %466 = vrot.lane.b32.xlu0 %v465, 96
  %v467 = vpop.permute.xlu0 %466
  %vm468 = vcmask 917248
  %s469 = scalar_lea.vmem %s1, 56
  %470 = vst.msk [vmem:[%s469] sm:$0xff] %vm468, %v467
  %s471 = scalar_lea.vmem %s0, 710
  %v472 = vld [vmem:[%s471] ss:$8 sm:$0xf]
  %s473 = scalar_lea.vmem %s0, 710
  %v474 = vld [vmem:[%s473] ss:$8 sm:$0xf0]
  %vm475 = vcmask 1047556
  %v476 = vsel %vm475, %v474, %v472
  %477 = vrot.lane.b32.xlu0 %v476, 96
  %v478 = vpop.permute.xlu0 %477
  %vm479 = vcmask 917248
  %s480 = scalar_lea.vmem %s1, 88
  %481 = vst.msk [vmem:[%s480] sm:$0xff] %vm479, %v478
  %s482 = scalar_lea.vmem %s0, 966
  %v483 = vld [vmem:[%s482] ss:$8 sm:$0xf]
  %s484 = scalar_lea.vmem %s0, 966
  %v485 = vld [vmem:[%s484] ss:$8 sm:$0xf0]
  %vm486 = vcmask 1047556
  %v487 = vsel %vm486, %v485, %v483
  %488 = vrot.lane.b32.xlu0 %v487, 96
  %v489 = vpop.permute.xlu0 %488
  %vm490 = vcmask 917248
  %s491 = scalar_lea.vmem %s1, 120
  %492 = vst.msk [vmem:[%s491] sm:$0xff] %vm490, %v489
  %s493 = scalar_lea.vmem %s0, 5
  %v494 = vld [vmem:[%s493] ss:$8 sm:$0xf]
  %s495 = scalar_lea.vmem %s0, 5
  %v496 = vld [vmem:[%s495] ss:$8 sm:$0xf0]
  %vm497 = vcmask 1047556
  %v498 = vsel %vm497, %v496, %v494
  %499 = vrot.lane.b32.xlu0 %v498, 80
  %v500 = vpop.permute.xlu0 %499
  %vm501 = vcmask 786048
  %502 = vst.msk [vmem:[%s1] sm:$0xff] %vm501, %v500
  %s503 = scalar_lea.vmem %s0, 261
  %v504 = vld [vmem:[%s503] ss:$8 sm:$0xf]
  %s505 = scalar_lea.vmem %s0, 261
  %v506 = vld [vmem:[%s505] ss:$8 sm:$0xf0]
  %vm507 = vcmask 1047556
  %v508 = vsel %vm507, %v506, %v504
  %509 = vrot.lane.b32.xlu0 %v508, 80
  %v510 = vpop.permute.xlu0 %509
  %vm511 = vcmask 786048
  %s512 = scalar_lea.vmem %s1, 32
  %513 = vst.msk [vmem:[%s512] sm:$0xff] %vm511, %v510
  %s514 = scalar_lea.vmem %s0, 517
  %v515 = vld [vmem:[%s514] ss:$8 sm:$0xf]
  %s516 = scalar_lea.vmem %s0, 517
  %v517 = vld [vmem:[%s516] ss:$8 sm:$0xf0]
  %vm518 = vcmask 1047556
  %v519 = vsel %vm518, %v517, %v515
  %520 = vrot.lane.b32.xlu0 %v519, 80
  %v521 = vpop.permute.xlu0 %520
  %vm522 = vcmask 786048
  %s523 = scalar_lea.vmem %s1, 64
  %524 = vst.msk [vmem:[%s523] sm:$0xff] %vm522, %v521
  %s525 = scalar_lea.vmem %s0, 773
  %v526 = vld [vmem:[%s525] ss:$8 sm:$0xf]
  %s527 = scalar_lea.vmem %s0, 773
  %v528 = vld [vmem:[%s527] ss:$8 sm:$0xf0]
  %vm529 = vcmask 1047556
  %v530 = vsel %vm529, %v528, %v526
  %531 = vrot.lane.b32.xlu0 %v530, 80
  %v532 = vpop.permute.xlu0 %531
  %vm533 = vcmask 786048
  %s534 = scalar_lea.vmem %s1, 96
  %535 = vst.msk [vmem:[%s534] sm:$0xff] %vm533, %v532
  %s536 = scalar_lea.vmem %s0, 69
  %v537 = vld [vmem:[%s536] ss:$8 sm:$0xf]
  %s538 = scalar_lea.vmem %s0, 69
  %v539 = vld [vmem:[%s538] ss:$8 sm:$0xf0]
  %vm540 = vcmask 1047556
  %v541 = vsel %vm540, %v539, %v537
  %542 = vrot.lane.b32.xlu0 %v541, 80
  %v543 = vpop.permute.xlu0 %542
  %vm544 = vcmask 786048
  %s545 = scalar_lea.vmem %s1, 8
  %546 = vst.msk [vmem:[%s545] sm:$0xff] %vm544, %v543
  %s547 = scalar_lea.vmem %s0, 325
  %v548 = vld [vmem:[%s547] ss:$8 sm:$0xf]
  %s549 = scalar_lea.vmem %s0, 325
  %v550 = vld [vmem:[%s549] ss:$8 sm:$0xf0]
  %vm551 = vcmask 1047556
  %v552 = vsel %vm551, %v550, %v548
  %553 = vrot.lane.b32.xlu0 %v552, 80
  %v554 = vpop.permute.xlu0 %553
  %vm555 = vcmask 786048
  %s556 = scalar_lea.vmem %s1, 40
  %557 = vst.msk [vmem:[%s556] sm:$0xff] %vm555, %v554
  %s558 = scalar_lea.vmem %s0, 581
  %v559 = vld [vmem:[%s558] ss:$8 sm:$0xf]
  %s560 = scalar_lea.vmem %s0, 581
  %v561 = vld [vmem:[%s560] ss:$8 sm:$0xf0]
  %vm562 = vcmask 1047556
  %v563 = vsel %vm562, %v561, %v559
  %564 = vrot.lane.b32.xlu0 %v563, 80
  %v565 = vpop.permute.xlu0 %564
  %vm566 = vcmask 786048
  %s567 = scalar_lea.vmem %s1, 72
  %568 = vst.msk [vmem:[%s567] sm:$0xff] %vm566, %v565
  %s569 = scalar_lea.vmem %s0, 837
  %v570 = vld [vmem:[%s569] ss:$8 sm:$0xf]
  %s571 = scalar_lea.vmem %s0, 837
  %v572 = vld [vmem:[%s571] ss:$8 sm:$0xf0]
  %vm573 = vcmask 1047556
  %v574 = vsel %vm573, %v572, %v570
  %575 = vrot.lane.b32.xlu0 %v574, 80
  %v576 = vpop.permute.xlu0 %575
  %vm577 = vcmask 786048
  %s578 = scalar_lea.vmem %s1, 104
  %579 = vst.msk [vmem:[%s578] sm:$0xff] %vm577, %v576
  %s580 = scalar_lea.vmem %s0, 133
  %v581 = vld [vmem:[%s580] ss:$8 sm:$0xf]
  %s582 = scalar_lea.vmem %s0, 133
  %v583 = vld [vmem:[%s582] ss:$8 sm:$0xf0]
  %vm584 = vcmask 1047556
  %v585 = vsel %vm584, %v583, %v581
  %586 = vrot.lane.b32.xlu0 %v585, 80
  %v587 = vpop.permute.xlu0 %586
  %vm588 = vcmask 786048
  %s589 = scalar_lea.vmem %s1, 16
  %590 = vst.msk [vmem:[%s589] sm:$0xff] %vm588, %v587
  %s591 = scalar_lea.vmem %s0, 389
  %v592 = vld [vmem:[%s591] ss:$8 sm:$0xf]
  %s593 = scalar_lea.vmem %s0, 389
  %v594 = vld [vmem:[%s593] ss:$8 sm:$0xf0]
  %vm595 = vcmask 1047556
  %v596 = vsel %vm595, %v594, %v592
  %597 = vrot.lane.b32.xlu0 %v596, 80
  %v598 = vpop.permute.xlu0 %597
  %vm599 = vcmask 786048
  %s600 = scalar_lea.vmem %s1, 48
  %601 = vst.msk [vmem:[%s600] sm:$0xff] %vm599, %v598
  %s602 = scalar_lea.vmem %s0, 645
  %v603 = vld [vmem:[%s602] ss:$8 sm:$0xf]
  %s604 = scalar_lea.vmem %s0, 645
  %v605 = vld [vmem:[%s604] ss:$8 sm:$0xf0]
  %vm606 = vcmask 1047556
  %v607 = vsel %vm606, %v605, %v603
  %608 = vrot.lane.b32.xlu0 %v607, 80
  %v609 = vpop.permute.xlu0 %608
  %vm610 = vcmask 786048
  %s611 = scalar_lea.vmem %s1, 80
  %612 = vst.msk [vmem:[%s611] sm:$0xff] %vm610, %v609
  %s613 = scalar_lea.vmem %s0, 901
  %v614 = vld [vmem:[%s613] ss:$8 sm:$0xf]
  %s615 = scalar_lea.vmem %s0, 901
  %v616 = vld [vmem:[%s615] ss:$8 sm:$0xf0]
  %vm617 = vcmask 1047556
  %v618 = vsel %vm617, %v616, %v614
  %619 = vrot.lane.b32.xlu0 %v618, 80
  %v620 = vpop.permute.xlu0 %619
  %vm621 = vcmask 786048
  %s622 = scalar_lea.vmem %s1, 112
  %623 = vst.msk [vmem:[%s622] sm:$0xff] %vm621, %v620
  %s624 = scalar_lea.vmem %s0, 197
  %v625 = vld [vmem:[%s624] ss:$8 sm:$0xf]
  %s626 = scalar_lea.vmem %s0, 197
  %v627 = vld [vmem:[%s626] ss:$8 sm:$0xf0]
  %vm628 = vcmask 1047556
  %v629 = vsel %vm628, %v627, %v625
  %630 = vrot.lane.b32.xlu0 %v629, 80
  %v631 = vpop.permute.xlu0 %630
  %vm632 = vcmask 786048
  %s633 = scalar_lea.vmem %s1, 24
  %634 = vst.msk [vmem:[%s633] sm:$0xff] %vm632, %v631
  %s635 = scalar_lea.vmem %s0, 453
  %v636 = vld [vmem:[%s635] ss:$8 sm:$0xf]
  %s637 = scalar_lea.vmem %s0, 453
  %v638 = vld [vmem:[%s637] ss:$8 sm:$0xf0]
  %vm639 = vcmask 1047556
  %v640 = vsel %vm639, %v638, %v636
  %641 = vrot.lane.b32.xlu0 %v640, 80
  %v642 = vpop.permute.xlu0 %641
  %vm643 = vcmask 786048
  %s644 = scalar_lea.vmem %s1, 56
  %645 = vst.msk [vmem:[%s644] sm:$0xff] %vm643, %v642
  %s646 = scalar_lea.vmem %s0, 709
  %v647 = vld [vmem:[%s646] ss:$8 sm:$0xf]
  %s648 = scalar_lea.vmem %s0, 709
  %v649 = vld [vmem:[%s648] ss:$8 sm:$0xf0]
  %vm650 = vcmask 1047556
  %v651 = vsel %vm650, %v649, %v647
  %652 = vrot.lane.b32.xlu0 %v651, 80
  %v653 = vpop.permute.xlu0 %652
  %vm654 = vcmask 786048
  %s655 = scalar_lea.vmem %s1, 88
  %656 = vst.msk [vmem:[%s655] sm:$0xff] %vm654, %v653
  %s657 = scalar_lea.vmem %s0, 965
  %v658 = vld [vmem:[%s657] ss:$8 sm:$0xf]
  %s659 = scalar_lea.vmem %s0, 965
  %v660 = vld [vmem:[%s659] ss:$8 sm:$0xf0]
  %vm661 = vcmask 1047556
  %v662 = vsel %vm661, %v660, %v658
  %663 = vrot.lane.b32.xlu0 %v662, 80
  %v664 = vpop.permute.xlu0 %663
  %vm665 = vcmask 786048
  %s666 = scalar_lea.vmem %s1, 120
  %667 = vst.msk [vmem:[%s666] sm:$0xff] %vm665, %v664
  %s668 = scalar_lea.vmem %s0, 4
  %v669 = vld [vmem:[%s668] ss:$8 sm:$0xf]
  %s670 = scalar_lea.vmem %s0, 4
  %v671 = vld [vmem:[%s670] ss:$8 sm:$0xf0]
  %vm672 = vcmask 1047556
  %v673 = vsel %vm672, %v671, %v669
  %674 = vrot.lane.b32.xlu0 %v673, 64
  %v675 = vpop.permute.xlu0 %674
  %vm676 = vcmask 654848
  %677 = vst.msk [vmem:[%s1] sm:$0xff] %vm676, %v675
  %s678 = scalar_lea.vmem %s0, 260
  %v679 = vld [vmem:[%s678] ss:$8 sm:$0xf]
  %s680 = scalar_lea.vmem %s0, 260
  %v681 = vld [vmem:[%s680] ss:$8 sm:$0xf0]
  %vm682 = vcmask 1047556
  %v683 = vsel %vm682, %v681, %v679
  %684 = vrot.lane.b32.xlu0 %v683, 64
  %v685 = vpop.permute.xlu0 %684
  %vm686 = vcmask 654848
  %s687 = scalar_lea.vmem %s1, 32
  %688 = vst.msk [vmem:[%s687] sm:$0xff] %vm686, %v685
  %s689 = scalar_lea.vmem %s0, 516
  %v690 = vld [vmem:[%s689] ss:$8 sm:$0xf]
  %s691 = scalar_lea.vmem %s0, 516
  %v692 = vld [vmem:[%s691] ss:$8 sm:$0xf0]
  %vm693 = vcmask 1047556
  %v694 = vsel %vm693, %v692, %v690
  %695 = vrot.lane.b32.xlu0 %v694, 64
  %v696 = vpop.permute.xlu0 %695
  %vm697 = vcmask 654848
  %s698 = scalar_lea.vmem %s1, 64
  %699 = vst.msk [vmem:[%s698] sm:$0xff] %vm697, %v696
  %s700 = scalar_lea.vmem %s0, 772
  %v701 = vld [vmem:[%s700] ss:$8 sm:$0xf]
  %s702 = scalar_lea.vmem %s0, 772
  %v703 = vld [vmem:[%s702] ss:$8 sm:$0xf0]
  %vm704 = vcmask 1047556
  %v705 = vsel %vm704, %v703, %v701
  %706 = vrot.lane.b32.xlu0 %v705, 64
  %v707 = vpop.permute.xlu0 %706
  %vm708 = vcmask 654848
  %s709 = scalar_lea.vmem %s1, 96
  %710 = vst.msk [vmem:[%s709] sm:$0xff] %vm708, %v707
  %s711 = scalar_lea.vmem %s0, 68
  %v712 = vld [vmem:[%s711] ss:$8 sm:$0xf]
  %s713 = scalar_lea.vmem %s0, 68
  %v714 = vld [vmem:[%s713] ss:$8 sm:$0xf0]
  %vm715 = vcmask 1047556
  %v716 = vsel %vm715, %v714, %v712
  %717 = vrot.lane.b32.xlu0 %v716, 64
  %v718 = vpop.permute.xlu0 %717
  %vm719 = vcmask 654848
  %s720 = scalar_lea.vmem %s1, 8
  %721 = vst.msk [vmem:[%s720] sm:$0xff] %vm719, %v718
  %s722 = scalar_lea.vmem %s0, 324
  %v723 = vld [vmem:[%s722] ss:$8 sm:$0xf]
  %s724 = scalar_lea.vmem %s0, 324
  %v725 = vld [vmem:[%s724] ss:$8 sm:$0xf0]
  %vm726 = vcmask 1047556
  %v727 = vsel %vm726, %v725, %v723
  %728 = vrot.lane.b32.xlu0 %v727, 64
  %v729 = vpop.permute.xlu0 %728
  %vm730 = vcmask 654848
  %s731 = scalar_lea.vmem %s1, 40
  %732 = vst.msk [vmem:[%s731] sm:$0xff] %vm730, %v729
  %s733 = scalar_lea.vmem %s0, 580
  %v734 = vld [vmem:[%s733] ss:$8 sm:$0xf]
  %s735 = scalar_lea.vmem %s0, 580
  %v736 = vld [vmem:[%s735] ss:$8 sm:$0xf0]
  %vm737 = vcmask 1047556
  %v738 = vsel %vm737, %v736, %v734
  %739 = vrot.lane.b32.xlu0 %v738, 64
  %v740 = vpop.permute.xlu0 %739
  %vm741 = vcmask 654848
  %s742 = scalar_lea.vmem %s1, 72
  %743 = vst.msk [vmem:[%s742] sm:$0xff] %vm741, %v740
  %s744 = scalar_lea.vmem %s0, 836
  %v745 = vld [vmem:[%s744] ss:$8 sm:$0xf]
  %s746 = scalar_lea.vmem %s0, 836
  %v747 = vld [vmem:[%s746] ss:$8 sm:$0xf0]
  %vm748 = vcmask 1047556
  %v749 = vsel %vm748, %v747, %v745
  %750 = vrot.lane.b32.xlu0 %v749, 64
  %v751 = vpop.permute.xlu0 %750
  %vm752 = vcmask 654848
  %s753 = scalar_lea.vmem %s1, 104
  %754 = vst.msk [vmem:[%s753] sm:$0xff] %vm752, %v751
  %s755 = scalar_lea.vmem %s0, 132
  %v756 = vld [vmem:[%s755] ss:$8 sm:$0xf]
  %s757 = scalar_lea.vmem %s0, 132
  %v758 = vld [vmem:[%s757] ss:$8 sm:$0xf0]
  %vm759 = vcmask 1047556
  %v760 = vsel %vm759, %v758, %v756
  %761 = vrot.lane.b32.xlu0 %v760, 64
  %v762 = vpop.permute.xlu0 %761
  %vm763 = vcmask 654848
  %s764 = scalar_lea.vmem %s1, 16
  %765 = vst.msk [vmem:[%s764] sm:$0xff] %vm763, %v762
  %s766 = scalar_lea.vmem %s0, 388
  %v767 = vld [vmem:[%s766] ss:$8 sm:$0xf]
  %s768 = scalar_lea.vmem %s0, 388
  %v769 = vld [vmem:[%s768] ss:$8 sm:$0xf0]
  %vm770 = vcmask 1047556
  %v771 = vsel %vm770, %v769, %v767
  %772 = vrot.lane.b32.xlu0 %v771, 64
  %v773 = vpop.permute.xlu0 %772
  %vm774 = vcmask 654848
  %s775 = scalar_lea.vmem %s1, 48
  %776 = vst.msk [vmem:[%s775] sm:$0xff] %vm774, %v773
  %s777 = scalar_lea.vmem %s0, 644
  %v778 = vld [vmem:[%s777] ss:$8 sm:$0xf]
  %s779 = scalar_lea.vmem %s0, 644
  %v780 = vld [vmem:[%s779] ss:$8 sm:$0xf0]
  %vm781 = vcmask 1047556
  %v782 = vsel %vm781, %v780, %v778
  %783 = vrot.lane.b32.xlu0 %v782, 64
  %v784 = vpop.permute.xlu0 %783
  %vm785 = vcmask 654848
  %s786 = scalar_lea.vmem %s1, 80
  %787 = vst.msk [vmem:[%s786] sm:$0xff] %vm785, %v784
  %s788 = scalar_lea.vmem %s0, 900
  %v789 = vld [vmem:[%s788] ss:$8 sm:$0xf]
  %s790 = scalar_lea.vmem %s0, 900
  %v791 = vld [vmem:[%s790] ss:$8 sm:$0xf0]
  %vm792 = vcmask 1047556
  %v793 = vsel %vm792, %v791, %v789
  %794 = vrot.lane.b32.xlu0 %v793, 64
  %v795 = vpop.permute.xlu0 %794
  %vm796 = vcmask 654848
  %s797 = scalar_lea.vmem %s1, 112
  %798 = vst.msk [vmem:[%s797] sm:$0xff] %vm796, %v795
  %s799 = scalar_lea.vmem %s0, 196
  %v800 = vld [vmem:[%s799] ss:$8 sm:$0xf]
  %s801 = scalar_lea.vmem %s0, 196
  %v802 = vld [vmem:[%s801] ss:$8 sm:$0xf0]
  %vm803 = vcmask 1047556
  %v804 = vsel %vm803, %v802, %v800
  %805 = vrot.lane.b32.xlu0 %v804, 64
  %v806 = vpop.permute.xlu0 %805
  %vm807 = vcmask 654848
  %s808 = scalar_lea.vmem %s1, 24
  %809 = vst.msk [vmem:[%s808] sm:$0xff] %vm807, %v806
  %s810 = scalar_lea.vmem %s0, 452
  %v811 = vld [vmem:[%s810] ss:$8 sm:$0xf]
  %s812 = scalar_lea.vmem %s0, 452
  %v813 = vld [vmem:[%s812] ss:$8 sm:$0xf0]
  %vm814 = vcmask 1047556
  %v815 = vsel %vm814, %v813, %v811
  %816 = vrot.lane.b32.xlu0 %v815, 64
  %v817 = vpop.permute.xlu0 %816
  %vm818 = vcmask 654848
  %s819 = scalar_lea.vmem %s1, 56
  %820 = vst.msk [vmem:[%s819] sm:$0xff] %vm818, %v817
  %s821 = scalar_lea.vmem %s0, 708
  %v822 = vld [vmem:[%s821] ss:$8 sm:$0xf]
  %s823 = scalar_lea.vmem %s0, 708
  %v824 = vld [vmem:[%s823] ss:$8 sm:$0xf0]
  %vm825 = vcmask 1047556
  %v826 = vsel %vm825, %v824, %v822
  %827 = vrot.lane.b32.xlu0 %v826, 64
  %v828 = vpop.permute.xlu0 %827
  %vm829 = vcmask 654848
  %s830 = scalar_lea.vmem %s1, 88
  %831 = vst.msk [vmem:[%s830] sm:$0xff] %vm829, %v828
  %s832 = scalar_lea.vmem %s0, 964
  %v833 = vld [vmem:[%s832] ss:$8 sm:$0xf]
  %s834 = scalar_lea.vmem %s0, 964
  %v835 = vld [vmem:[%s834] ss:$8 sm:$0xf0]
  %vm836 = vcmask 1047556
  %v837 = vsel %vm836, %v835, %v833
  %838 = vrot.lane.b32.xlu0 %v837, 64
  %v839 = vpop.permute.xlu0 %838
  %vm840 = vcmask 654848
  %s841 = scalar_lea.vmem %s1, 120
  %842 = vst.msk [vmem:[%s841] sm:$0xff] %vm840, %v839
  %s843 = scalar_lea.vmem %s0, 3
  %v844 = vld [vmem:[%s843] ss:$8 sm:$0xf]
  %s845 = scalar_lea.vmem %s0, 3
  %v846 = vld [vmem:[%s845] ss:$8 sm:$0xf0]
  %vm847 = vcmask 1047556
  %v848 = vsel %vm847, %v846, %v844
  %849 = vrot.lane.b32.xlu0 %v848, 48
  %v850 = vpop.permute.xlu0 %849
  %vm851 = vcmask 523648
  %852 = vst.msk [vmem:[%s1] sm:$0xff] %vm851, %v850
  %s853 = scalar_lea.vmem %s0, 259
  %v854 = vld [vmem:[%s853] ss:$8 sm:$0xf]
  %s855 = scalar_lea.vmem %s0, 259
  %v856 = vld [vmem:[%s855] ss:$8 sm:$0xf0]
  %vm857 = vcmask 1047556
  %v858 = vsel %vm857, %v856, %v854
  %859 = vrot.lane.b32.xlu0 %v858, 48
  %v860 = vpop.permute.xlu0 %859
  %vm861 = vcmask 523648
  %s862 = scalar_lea.vmem %s1, 32
  %863 = vst.msk [vmem:[%s862] sm:$0xff] %vm861, %v860
  %s864 = scalar_lea.vmem %s0, 515
  %v865 = vld [vmem:[%s864] ss:$8 sm:$0xf]
  %s866 = scalar_lea.vmem %s0, 515
  %v867 = vld [vmem:[%s866] ss:$8 sm:$0xf0]
  %vm868 = vcmask 1047556
  %v869 = vsel %vm868, %v867, %v865
  %870 = vrot.lane.b32.xlu0 %v869, 48
  %v871 = vpop.permute.xlu0 %870
  %vm872 = vcmask 523648
  %s873 = scalar_lea.vmem %s1, 64
  %874 = vst.msk [vmem:[%s873] sm:$0xff] %vm872, %v871
  %s875 = scalar_lea.vmem %s0, 771
  %v876 = vld [vmem:[%s875] ss:$8 sm:$0xf]
  %s877 = scalar_lea.vmem %s0, 771
  %v878 = vld [vmem:[%s877] ss:$8 sm:$0xf0]
  %vm879 = vcmask 1047556
  %v880 = vsel %vm879, %v878, %v876
  %881 = vrot.lane.b32.xlu0 %v880, 48
  %v882 = vpop.permute.xlu0 %881
  %vm883 = vcmask 523648
  %s884 = scalar_lea.vmem %s1, 96
  %885 = vst.msk [vmem:[%s884] sm:$0xff] %vm883, %v882
  %s886 = scalar_lea.vmem %s0, 67
  %v887 = vld [vmem:[%s886] ss:$8 sm:$0xf]
  %s888 = scalar_lea.vmem %s0, 67
  %v889 = vld [vmem:[%s888] ss:$8 sm:$0xf0]
  %vm890 = vcmask 1047556
  %v891 = vsel %vm890, %v889, %v887
  %892 = vrot.lane.b32.xlu0 %v891, 48
  %v893 = vpop.permute.xlu0 %892
  %vm894 = vcmask 523648
  %s895 = scalar_lea.vmem %s1, 8
  %896 = vst.msk [vmem:[%s895] sm:$0xff] %vm894, %v893
  %s897 = scalar_lea.vmem %s0, 323
  %v898 = vld [vmem:[%s897] ss:$8 sm:$0xf]
  %s899 = scalar_lea.vmem %s0, 323
  %v900 = vld [vmem:[%s899] ss:$8 sm:$0xf0]
  %vm901 = vcmask 1047556
  %v902 = vsel %vm901, %v900, %v898
  %903 = vrot.lane.b32.xlu0 %v902, 48
  %v904 = vpop.permute.xlu0 %903
  %vm905 = vcmask 523648
  %s906 = scalar_lea.vmem %s1, 40
  %907 = vst.msk [vmem:[%s906] sm:$0xff] %vm905, %v904
  %s908 = scalar_lea.vmem %s0, 579
  %v909 = vld [vmem:[%s908] ss:$8 sm:$0xf]
  %s910 = scalar_lea.vmem %s0, 579
  %v911 = vld [vmem:[%s910] ss:$8 sm:$0xf0]
  %vm912 = vcmask 1047556
  %v913 = vsel %vm912, %v911, %v909
  %914 = vrot.lane.b32.xlu0 %v913, 48
  %v915 = vpop.permute.xlu0 %914
  %vm916 = vcmask 523648
  %s917 = scalar_lea.vmem %s1, 72
  %918 = vst.msk [vmem:[%s917] sm:$0xff] %vm916, %v915
  %s919 = scalar_lea.vmem %s0, 835
  %v920 = vld [vmem:[%s919] ss:$8 sm:$0xf]
  %s921 = scalar_lea.vmem %s0, 835
  %v922 = vld [vmem:[%s921] ss:$8 sm:$0xf0]
  %vm923 = vcmask 1047556
  %v924 = vsel %vm923, %v922, %v920
  %925 = vrot.lane.b32.xlu0 %v924, 48
  %v926 = vpop.permute.xlu0 %925
  %vm927 = vcmask 523648
  %s928 = scalar_lea.vmem %s1, 104
  %929 = vst.msk [vmem:[%s928] sm:$0xff] %vm927, %v926
  %s930 = scalar_lea.vmem %s0, 131
  %v931 = vld [vmem:[%s930] ss:$8 sm:$0xf]
  %s932 = scalar_lea.vmem %s0, 131
  %v933 = vld [vmem:[%s932] ss:$8 sm:$0xf0]
  %vm934 = vcmask 1047556
  %v935 = vsel %vm934, %v933, %v931
  %936 = vrot.lane.b32.xlu0 %v935, 48
  %v937 = vpop.permute.xlu0 %936
  %vm938 = vcmask 523648
  %s939 = scalar_lea.vmem %s1, 16
  %940 = vst.msk [vmem:[%s939] sm:$0xff] %vm938, %v937
  %s941 = scalar_lea.vmem %s0, 387
  %v942 = vld [vmem:[%s941] ss:$8 sm:$0xf]
  %s943 = scalar_lea.vmem %s0, 387
  %v944 = vld [vmem:[%s943] ss:$8 sm:$0xf0]
  %vm945 = vcmask 1047556
  %v946 = vsel %vm945, %v944, %v942
  %947 = vrot.lane.b32.xlu0 %v946, 48
  %v948 = vpop.permute.xlu0 %947
  %vm949 = vcmask 523648
  %s950 = scalar_lea.vmem %s1, 48
  %951 = vst.msk [vmem:[%s950] sm:$0xff] %vm949, %v948
  %s952 = scalar_lea.vmem %s0, 643
  %v953 = vld [vmem:[%s952] ss:$8 sm:$0xf]
  %s954 = scalar_lea.vmem %s0, 643
  %v955 = vld [vmem:[%s954] ss:$8 sm:$0xf0]
  %vm956 = vcmask 1047556
  %v957 = vsel %vm956, %v955, %v953
  %958 = vrot.lane.b32.xlu0 %v957, 48
  %v959 = vpop.permute.xlu0 %958
  %vm960 = vcmask 523648
  %s961 = scalar_lea.vmem %s1, 80
  %962 = vst.msk [vmem:[%s961] sm:$0xff] %vm960, %v959
  %s963 = scalar_lea.vmem %s0, 899
  %v964 = vld [vmem:[%s963] ss:$8 sm:$0xf]
  %s965 = scalar_lea.vmem %s0, 899
  %v966 = vld [vmem:[%s965] ss:$8 sm:$0xf0]
  %vm967 = vcmask 1047556
  %v968 = vsel %vm967, %v966, %v964
  %969 = vrot.lane.b32.xlu0 %v968, 48
  %v970 = vpop.permute.xlu0 %969
  %vm971 = vcmask 523648
  %s972 = scalar_lea.vmem %s1, 112
  %973 = vst.msk [vmem:[%s972] sm:$0xff] %vm971, %v970
  %s974 = scalar_lea.vmem %s0, 195
  %v975 = vld [vmem:[%s974] ss:$8 sm:$0xf]
  %s976 = scalar_lea.vmem %s0, 195
  %v977 = vld [vmem:[%s976] ss:$8 sm:$0xf0]
  %vm978 = vcmask 1047556
  %v979 = vsel %vm978, %v977, %v975
  %980 = vrot.lane.b32.xlu0 %v979, 48
  %v981 = vpop.permute.xlu0 %980
  %vm982 = vcmask 523648
  %s983 = scalar_lea.vmem %s1, 24
  %984 = vst.msk [vmem:[%s983] sm:$0xff] %vm982, %v981
  %s985 = scalar_lea.vmem %s0, 451
  %v986 = vld [vmem:[%s985] ss:$8 sm:$0xf]
  %s987 = scalar_lea.vmem %s0, 451
  %v988 = vld [vmem:[%s987] ss:$8 sm:$0xf0]
  %vm989 = vcmask 1047556
  %v990 = vsel %vm989, %v988, %v986
  %991 = vrot.lane.b32.xlu0 %v990, 48
  %v992 = vpop.permute.xlu0 %991
  %vm993 = vcmask 523648
  %s994 = scalar_lea.vmem %s1, 56
  %995 = vst.msk [vmem:[%s994] sm:$0xff] %vm993, %v992
  %s996 = scalar_lea.vmem %s0, 707
  %v997 = vld [vmem:[%s996] ss:$8 sm:$0xf]
  %s998 = scalar_lea.vmem %s0, 707
  %v999 = vld [vmem:[%s998] ss:$8 sm:$0xf0]
  %vm1000 = vcmask 1047556
  %v1001 = vsel %vm1000, %v999, %v997
  %1002 = vrot.lane.b32.xlu0 %v1001, 48
  %v1003 = vpop.permute.xlu0 %1002
  %vm1004 = vcmask 523648
  %s1005 = scalar_lea.vmem %s1, 88
  %1006 = vst.msk [vmem:[%s1005] sm:$0xff] %vm1004, %v1003
  %s1007 = scalar_lea.vmem %s0, 963
  %v1008 = vld [vmem:[%s1007] ss:$8 sm:$0xf]
  %s1009 = scalar_lea.vmem %s0, 963
  %v1010 = vld [vmem:[%s1009] ss:$8 sm:$0xf0]
  %vm1011 = vcmask 1047556
  %v1012 = vsel %vm1011, %v1010, %v1008
  %1013 = vrot.lane.b32.xlu0 %v1012, 48
  %v1014 = vpop.permute.xlu0 %1013
  %vm1015 = vcmask 523648
  %s1016 = scalar_lea.vmem %s1, 120
  %1017 = vst.msk [vmem:[%s1016] sm:$0xff] %vm1015, %v1014
  %s1018 = scalar_lea.vmem %s0, 2
  %v1019 = vld [vmem:[%s1018] ss:$8 sm:$0xf]
  %s1020 = scalar_lea.vmem %s0, 2
  %v1021 = vld [vmem:[%s1020] ss:$8 sm:$0xf0]
  %vm1022 = vcmask 1047556
  %v1023 = vsel %vm1022, %v1021, %v1019
  %1024 = vrot.lane.b32.xlu0 %v1023, 32
  %v1025 = vpop.permute.xlu0 %1024
  %vm1026 = vcmask 392448
  %1027 = vst.msk [vmem:[%s1] sm:$0xff] %vm1026, %v1025
  %s1028 = scalar_lea.vmem %s0, 258
  %v1029 = vld [vmem:[%s1028] ss:$8 sm:$0xf]
  %s1030 = scalar_lea.vmem %s0, 258
  %v1031 = vld [vmem:[%s1030] ss:$8 sm:$0xf0]
  %vm1032 = vcmask 1047556
  %v1033 = vsel %vm1032, %v1031, %v1029
  %1034 = vrot.lane.b32.xlu0 %v1033, 32
  %v1035 = vpop.permute.xlu0 %1034
  %vm1036 = vcmask 392448
  %s1037 = scalar_lea.vmem %s1, 32
  %1038 = vst.msk [vmem:[%s1037] sm:$0xff] %vm1036, %v1035
  %s1039 = scalar_lea.vmem %s0, 514
  %v1040 = vld [vmem:[%s1039] ss:$8 sm:$0xf]
  %s1041 = scalar_lea.vmem %s0, 514
  %v1042 = vld [vmem:[%s1041] ss:$8 sm:$0xf0]
  %vm1043 = vcmask 1047556
  %v1044 = vsel %vm1043, %v1042, %v1040
  %1045 = vrot.lane.b32.xlu0 %v1044, 32
  %v1046 = vpop.permute.xlu0 %1045
  %vm1047 = vcmask 392448
  %s1048 = scalar_lea.vmem %s1, 64
  %1049 = vst.msk [vmem:[%s1048] sm:$0xff] %vm1047, %v1046
  %s1050 = scalar_lea.vmem %s0, 770
  %v1051 = vld [vmem:[%s1050] ss:$8 sm:$0xf]
  %s1052 = scalar_lea.vmem %s0, 770
  %v1053 = vld [vmem:[%s1052] ss:$8 sm:$0xf0]
  %vm1054 = vcmask 1047556
  %v1055 = vsel %vm1054, %v1053, %v1051
  %1056 = vrot.lane.b32.xlu0 %v1055, 32
  %v1057 = vpop.permute.xlu0 %1056
  %vm1058 = vcmask 392448
  %s1059 = scalar_lea.vmem %s1, 96
  %1060 = vst.msk [vmem:[%s1059] sm:$0xff] %vm1058, %v1057
  %s1061 = scalar_lea.vmem %s0, 66
  %v1062 = vld [vmem:[%s1061] ss:$8 sm:$0xf]
  %s1063 = scalar_lea.vmem %s0, 66
  %v1064 = vld [vmem:[%s1063] ss:$8 sm:$0xf0]
  %vm1065 = vcmask 1047556
  %v1066 = vsel %vm1065, %v1064, %v1062
  %1067 = vrot.lane.b32.xlu0 %v1066, 32
  %v1068 = vpop.permute.xlu0 %1067
  %vm1069 = vcmask 392448
  %s1070 = scalar_lea.vmem %s1, 8
  %1071 = vst.msk [vmem:[%s1070] sm:$0xff] %vm1069, %v1068
  %s1072 = scalar_lea.vmem %s0, 322
  %v1073 = vld [vmem:[%s1072] ss:$8 sm:$0xf]
  %s1074 = scalar_lea.vmem %s0, 322
  %v1075 = vld [vmem:[%s1074] ss:$8 sm:$0xf0]
  %vm1076 = vcmask 1047556
  %v1077 = vsel %vm1076, %v1075, %v1073
  %1078 = vrot.lane.b32.xlu0 %v1077, 32
  %v1079 = vpop.permute.xlu0 %1078
  %vm1080 = vcmask 392448
  %s1081 = scalar_lea.vmem %s1, 40
  %1082 = vst.msk [vmem:[%s1081] sm:$0xff] %vm1080, %v1079
  %s1083 = scalar_lea.vmem %s0, 578
  %v1084 = vld [vmem:[%s1083] ss:$8 sm:$0xf]
  %s1085 = scalar_lea.vmem %s0, 578
  %v1086 = vld [vmem:[%s1085] ss:$8 sm:$0xf0]
  %vm1087 = vcmask 1047556
  %v1088 = vsel %vm1087, %v1086, %v1084
  %1089 = vrot.lane.b32.xlu0 %v1088, 32
  %v1090 = vpop.permute.xlu0 %1089
  %vm1091 = vcmask 392448
  %s1092 = scalar_lea.vmem %s1, 72
  %1093 = vst.msk [vmem:[%s1092] sm:$0xff] %vm1091, %v1090
  %s1094 = scalar_lea.vmem %s0, 834
  %v1095 = vld [vmem:[%s1094] ss:$8 sm:$0xf]
  %s1096 = scalar_lea.vmem %s0, 834
  %v1097 = vld [vmem:[%s1096] ss:$8 sm:$0xf0]
  %vm1098 = vcmask 1047556
  %v1099 = vsel %vm1098, %v1097, %v1095
  %1100 = vrot.lane.b32.xlu0 %v1099, 32
  %v1101 = vpop.permute.xlu0 %1100
  %vm1102 = vcmask 392448
  %s1103 = scalar_lea.vmem %s1, 104
  %1104 = vst.msk [vmem:[%s1103] sm:$0xff] %vm1102, %v1101
  %s1105 = scalar_lea.vmem %s0, 130
  %v1106 = vld [vmem:[%s1105] ss:$8 sm:$0xf]
  %s1107 = scalar_lea.vmem %s0, 130
  %v1108 = vld [vmem:[%s1107] ss:$8 sm:$0xf0]
  %vm1109 = vcmask 1047556
  %v1110 = vsel %vm1109, %v1108, %v1106
  %1111 = vrot.lane.b32.xlu0 %v1110, 32
  %v1112 = vpop.permute.xlu0 %1111
  %vm1113 = vcmask 392448
  %s1114 = scalar_lea.vmem %s1, 16
  %1115 = vst.msk [vmem:[%s1114] sm:$0xff] %vm1113, %v1112
  %s1116 = scalar_lea.vmem %s0, 386
  %v1117 = vld [vmem:[%s1116] ss:$8 sm:$0xf]
  %s1118 = scalar_lea.vmem %s0, 386
  %v1119 = vld [vmem:[%s1118] ss:$8 sm:$0xf0]
  %vm1120 = vcmask 1047556
  %v1121 = vsel %vm1120, %v1119, %v1117
  %1122 = vrot.lane.b32.xlu0 %v1121, 32
  %v1123 = vpop.permute.xlu0 %1122
  %vm1124 = vcmask 392448
  %s1125 = scalar_lea.vmem %s1, 48
  %1126 = vst.msk [vmem:[%s1125] sm:$0xff] %vm1124, %v1123
  %s1127 = scalar_lea.vmem %s0, 642
  %v1128 = vld [vmem:[%s1127] ss:$8 sm:$0xf]
  %s1129 = scalar_lea.vmem %s0, 642
  %v1130 = vld [vmem:[%s1129] ss:$8 sm:$0xf0]
  %vm1131 = vcmask 1047556
  %v1132 = vsel %vm1131, %v1130, %v1128
  %1133 = vrot.lane.b32.xlu0 %v1132, 32
  %v1134 = vpop.permute.xlu0 %1133
  %vm1135 = vcmask 392448
  %s1136 = scalar_lea.vmem %s1, 80
  %1137 = vst.msk [vmem:[%s1136] sm:$0xff] %vm1135, %v1134
  %s1138 = scalar_lea.vmem %s0, 898
  %v1139 = vld [vmem:[%s1138] ss:$8 sm:$0xf]
  %s1140 = scalar_lea.vmem %s0, 898
  %v1141 = vld [vmem:[%s1140] ss:$8 sm:$0xf0]
  %vm1142 = vcmask 1047556
  %v1143 = vsel %vm1142, %v1141, %v1139
  %1144 = vrot.lane.b32.xlu0 %v1143, 32
  %v1145 = vpop.permute.xlu0 %1144
  %vm1146 = vcmask 392448
  %s1147 = scalar_lea.vmem %s1, 112
  %1148 = vst.msk [vmem:[%s1147] sm:$0xff] %vm1146, %v1145
  %s1149 = scalar_lea.vmem %s0, 194
  %v1150 = vld [vmem:[%s1149] ss:$8 sm:$0xf]
  %s1151 = scalar_lea.vmem %s0, 194
  %v1152 = vld [vmem:[%s1151] ss:$8 sm:$0xf0]
  %vm1153 = vcmask 1047556
  %v1154 = vsel %vm1153, %v1152, %v1150
  %1155 = vrot.lane.b32.xlu0 %v1154, 32
  %v1156 = vpop.permute.xlu0 %1155
  %vm1157 = vcmask 392448
  %s1158 = scalar_lea.vmem %s1, 24
  %1159 = vst.msk [vmem:[%s1158] sm:$0xff] %vm1157, %v1156
  %s1160 = scalar_lea.vmem %s0, 450
  %v1161 = vld [vmem:[%s1160] ss:$8 sm:$0xf]
  %s1162 = scalar_lea.vmem %s0, 450
  %v1163 = vld [vmem:[%s1162] ss:$8 sm:$0xf0]
  %vm1164 = vcmask 1047556
  %v1165 = vsel %vm1164, %v1163, %v1161
  %1166 = vrot.lane.b32.xlu0 %v1165, 32
  %v1167 = vpop.permute.xlu0 %1166
  %vm1168 = vcmask 392448
  %s1169 = scalar_lea.vmem %s1, 56
  %1170 = vst.msk [vmem:[%s1169] sm:$0xff] %vm1168, %v1167
  %s1171 = scalar_lea.vmem %s0, 706
  %v1172 = vld [vmem:[%s1171] ss:$8 sm:$0xf]
  %s1173 = scalar_lea.vmem %s0, 706
  %v1174 = vld [vmem:[%s1173] ss:$8 sm:$0xf0]
  %vm1175 = vcmask 1047556
  %v1176 = vsel %vm1175, %v1174, %v1172
  %1177 = vrot.lane.b32.xlu0 %v1176, 32
  %v1178 = vpop.permute.xlu0 %1177
  %vm1179 = vcmask 392448
  %s1180 = scalar_lea.vmem %s1, 88
  %1181 = vst.msk [vmem:[%s1180] sm:$0xff] %vm1179, %v1178
  %s1182 = scalar_lea.vmem %s0, 962
  %v1183 = vld [vmem:[%s1182] ss:$8 sm:$0xf]
  %s1184 = scalar_lea.vmem %s0, 962
  %v1185 = vld [vmem:[%s1184] ss:$8 sm:$0xf0]
  %vm1186 = vcmask 1047556
  %v1187 = vsel %vm1186, %v1185, %v1183
  %1188 = vrot.lane.b32.xlu0 %v1187, 32
  %v1189 = vpop.permute.xlu0 %1188
  %vm1190 = vcmask 392448
  %s1191 = scalar_lea.vmem %s1, 120
  %1192 = vst.msk [vmem:[%s1191] sm:$0xff] %vm1190, %v1189
  %s1193 = scalar_lea.vmem %s0, 1
  %v1194 = vld [vmem:[%s1193] ss:$8 sm:$0xf]
  %s1195 = scalar_lea.vmem %s0, 1
  %v1196 = vld [vmem:[%s1195] ss:$8 sm:$0xf0]
  %vm1197 = vcmask 1047556
  %v1198 = vsel %vm1197, %v1196, %v1194
  %1199 = vrot.lane.b32.xlu0 %v1198, 16
  %v1200 = vpop.permute.xlu0 %1199
  %vm1201 = vcmask 261248
  %1202 = vst.msk [vmem:[%s1] sm:$0xff] %vm1201, %v1200
  %s1203 = scalar_lea.vmem %s0, 257
  %v1204 = vld [vmem:[%s1203] ss:$8 sm:$0xf]
  %s1205 = scalar_lea.vmem %s0, 257
  %v1206 = vld [vmem:[%s1205] ss:$8 sm:$0xf0]
  %vm1207 = vcmask 1047556
  %v1208 = vsel %vm1207, %v1206, %v1204
  %1209 = vrot.lane.b32.xlu0 %v1208, 16
  %v1210 = vpop.permute.xlu0 %1209
  %vm1211 = vcmask 261248
  %s1212 = scalar_lea.vmem %s1, 32
  %1213 = vst.msk [vmem:[%s1212] sm:$0xff] %vm1211, %v1210
  %s1214 = scalar_lea.vmem %s0, 513
  %v1215 = vld [vmem:[%s1214] ss:$8 sm:$0xf]
  %s1216 = scalar_lea.vmem %s0, 513
  %v1217 = vld [vmem:[%s1216] ss:$8 sm:$0xf0]
  %vm1218 = vcmask 1047556
  %v1219 = vsel %vm1218, %v1217, %v1215
  %1220 = vrot.lane.b32.xlu0 %v1219, 16
  %v1221 = vpop.permute.xlu0 %1220
  %vm1222 = vcmask 261248
  %s1223 = scalar_lea.vmem %s1, 64
  %1224 = vst.msk [vmem:[%s1223] sm:$0xff] %vm1222, %v1221
  %s1225 = scalar_lea.vmem %s0, 769
  %v1226 = vld [vmem:[%s1225] ss:$8 sm:$0xf]
  %s1227 = scalar_lea.vmem %s0, 769
  %v1228 = vld [vmem:[%s1227] ss:$8 sm:$0xf0]
  %vm1229 = vcmask 1047556
  %v1230 = vsel %vm1229, %v1228, %v1226
  %1231 = vrot.lane.b32.xlu0 %v1230, 16
  %v1232 = vpop.permute.xlu0 %1231
  %vm1233 = vcmask 261248
  %s1234 = scalar_lea.vmem %s1, 96
  %1235 = vst.msk [vmem:[%s1234] sm:$0xff] %vm1233, %v1232
  %s1236 = scalar_lea.vmem %s0, 65
  %v1237 = vld [vmem:[%s1236] ss:$8 sm:$0xf]
  %s1238 = scalar_lea.vmem %s0, 65
  %v1239 = vld [vmem:[%s1238] ss:$8 sm:$0xf0]
  %vm1240 = vcmask 1047556
  %v1241 = vsel %vm1240, %v1239, %v1237
  %1242 = vrot.lane.b32.xlu0 %v1241, 16
  %v1243 = vpop.permute.xlu0 %1242
  %vm1244 = vcmask 261248
  %s1245 = scalar_lea.vmem %s1, 8
  %1246 = vst.msk [vmem:[%s1245] sm:$0xff] %vm1244, %v1243
  %s1247 = scalar_lea.vmem %s0, 321
  %v1248 = vld [vmem:[%s1247] ss:$8 sm:$0xf]
  %s1249 = scalar_lea.vmem %s0, 321
  %v1250 = vld [vmem:[%s1249] ss:$8 sm:$0xf0]
  %vm1251 = vcmask 1047556
  %v1252 = vsel %vm1251, %v1250, %v1248
  %1253 = vrot.lane.b32.xlu0 %v1252, 16
  %v1254 = vpop.permute.xlu0 %1253
  %vm1255 = vcmask 261248
  %s1256 = scalar_lea.vmem %s1, 40
  %1257 = vst.msk [vmem:[%s1256] sm:$0xff] %vm1255, %v1254
  %s1258 = scalar_lea.vmem %s0, 577
  %v1259 = vld [vmem:[%s1258] ss:$8 sm:$0xf]
  %s1260 = scalar_lea.vmem %s0, 577
  %v1261 = vld [vmem:[%s1260] ss:$8 sm:$0xf0]
  %vm1262 = vcmask 1047556
  %v1263 = vsel %vm1262, %v1261, %v1259
  %1264 = vrot.lane.b32.xlu0 %v1263, 16
  %v1265 = vpop.permute.xlu0 %1264
  %vm1266 = vcmask 261248
  %s1267 = scalar_lea.vmem %s1, 72
  %1268 = vst.msk [vmem:[%s1267] sm:$0xff] %vm1266, %v1265
  %s1269 = scalar_lea.vmem %s0, 833
  %v1270 = vld [vmem:[%s1269] ss:$8 sm:$0xf]
  %s1271 = scalar_lea.vmem %s0, 833
  %v1272 = vld [vmem:[%s1271] ss:$8 sm:$0xf0]
  %vm1273 = vcmask 1047556
  %v1274 = vsel %vm1273, %v1272, %v1270
  %1275 = vrot.lane.b32.xlu0 %v1274, 16
  %v1276 = vpop.permute.xlu0 %1275
  %vm1277 = vcmask 261248
  %s1278 = scalar_lea.vmem %s1, 104
  %1279 = vst.msk [vmem:[%s1278] sm:$0xff] %vm1277, %v1276
  %s1280 = scalar_lea.vmem %s0, 129
  %v1281 = vld [vmem:[%s1280] ss:$8 sm:$0xf]
  %s1282 = scalar_lea.vmem %s0, 129
  %v1283 = vld [vmem:[%s1282] ss:$8 sm:$0xf0]
  %vm1284 = vcmask 1047556
  %v1285 = vsel %vm1284, %v1283, %v1281
  %1286 = vrot.lane.b32.xlu0 %v1285, 16
  %v1287 = vpop.permute.xlu0 %1286
  %vm1288 = vcmask 261248
  %s1289 = scalar_lea.vmem %s1, 16
  %1290 = vst.msk [vmem:[%s1289] sm:$0xff] %vm1288, %v1287
  %s1291 = scalar_lea.vmem %s0, 385
  %v1292 = vld [vmem:[%s1291] ss:$8 sm:$0xf]
  %s1293 = scalar_lea.vmem %s0, 385
  %v1294 = vld [vmem:[%s1293] ss:$8 sm:$0xf0]
  %vm1295 = vcmask 1047556
  %v1296 = vsel %vm1295, %v1294, %v1292
  %1297 = vrot.lane.b32.xlu0 %v1296, 16
  %v1298 = vpop.permute.xlu0 %1297
  %vm1299 = vcmask 261248
  %s1300 = scalar_lea.vmem %s1, 48
  %1301 = vst.msk [vmem:[%s1300] sm:$0xff] %vm1299, %v1298
  %s1302 = scalar_lea.vmem %s0, 641
  %v1303 = vld [vmem:[%s1302] ss:$8 sm:$0xf]
  %s1304 = scalar_lea.vmem %s0, 641
  %v1305 = vld [vmem:[%s1304] ss:$8 sm:$0xf0]
  %vm1306 = vcmask 1047556
  %v1307 = vsel %vm1306, %v1305, %v1303
  %1308 = vrot.lane.b32.xlu0 %v1307, 16
  %v1309 = vpop.permute.xlu0 %1308
  %vm1310 = vcmask 261248
  %s1311 = scalar_lea.vmem %s1, 80
  %1312 = vst.msk [vmem:[%s1311] sm:$0xff] %vm1310, %v1309
  %s1313 = scalar_lea.vmem %s0, 897
  %v1314 = vld [vmem:[%s1313] ss:$8 sm:$0xf]
  %s1315 = scalar_lea.vmem %s0, 897
  %v1316 = vld [vmem:[%s1315] ss:$8 sm:$0xf0]
  %vm1317 = vcmask 1047556
  %v1318 = vsel %vm1317, %v1316, %v1314
  %1319 = vrot.lane.b32.xlu0 %v1318, 16
  %v1320 = vpop.permute.xlu0 %1319
  %vm1321 = vcmask 261248
  %s1322 = scalar_lea.vmem %s1, 112
  %1323 = vst.msk [vmem:[%s1322] sm:$0xff] %vm1321, %v1320
  %s1324 = scalar_lea.vmem %s0, 193
  %v1325 = vld [vmem:[%s1324] ss:$8 sm:$0xf]
  %s1326 = scalar_lea.vmem %s0, 193
  %v1327 = vld [vmem:[%s1326] ss:$8 sm:$0xf0]
  %vm1328 = vcmask 1047556
  %v1329 = vsel %vm1328, %v1327, %v1325
  %1330 = vrot.lane.b32.xlu0 %v1329, 16
  %v1331 = vpop.permute.xlu0 %1330
  %vm1332 = vcmask 261248
  %s1333 = scalar_lea.vmem %s1, 24
  %1334 = vst.msk [vmem:[%s1333] sm:$0xff] %vm1332, %v1331
  %s1335 = scalar_lea.vmem %s0, 449
  %v1336 = vld [vmem:[%s1335] ss:$8 sm:$0xf]
  %s1337 = scalar_lea.vmem %s0, 449
  %v1338 = vld [vmem:[%s1337] ss:$8 sm:$0xf0]
  %vm1339 = vcmask 1047556
  %v1340 = vsel %vm1339, %v1338, %v1336
  %1341 = vrot.lane.b32.xlu0 %v1340, 16
  %v1342 = vpop.permute.xlu0 %1341
  %vm1343 = vcmask 261248
  %s1344 = scalar_lea.vmem %s1, 56
  %1345 = vst.msk [vmem:[%s1344] sm:$0xff] %vm1343, %v1342
  %s1346 = scalar_lea.vmem %s0, 705
  %v1347 = vld [vmem:[%s1346] ss:$8 sm:$0xf]
  %s1348 = scalar_lea.vmem %s0, 705
  %v1349 = vld [vmem:[%s1348] ss:$8 sm:$0xf0]
  %vm1350 = vcmask 1047556
  %v1351 = vsel %vm1350, %v1349, %v1347
  %1352 = vrot.lane.b32.xlu0 %v1351, 16
  %v1353 = vpop.permute.xlu0 %1352
  %vm1354 = vcmask 261248
  %s1355 = scalar_lea.vmem %s1, 88
  %1356 = vst.msk [vmem:[%s1355] sm:$0xff] %vm1354, %v1353
  %s1357 = scalar_lea.vmem %s0, 961
  %v1358 = vld [vmem:[%s1357] ss:$8 sm:$0xf]
  %s1359 = scalar_lea.vmem %s0, 961
  %v1360 = vld [vmem:[%s1359] ss:$8 sm:$0xf0]
  %vm1361 = vcmask 1047556
  %v1362 = vsel %vm1361, %v1360, %v1358
  %1363 = vrot.lane.b32.xlu0 %v1362, 16
  %v1364 = vpop.permute.xlu0 %1363
  %vm1365 = vcmask 261248
  %s1366 = scalar_lea.vmem %s1, 120
  %1367 = vst.msk [vmem:[%s1366] sm:$0xff] %vm1365, %v1364

// kernel: fwd.1
$region0: #{fwd.1}
  #allocation0 [shape = 'u32[]', space=smem, size = 0x4, offset = 0x4, fixed_abs, tag = 'smem constant byte address 0x4 - core index']
  #allocation1 [shape = 'u32[144,128]{1,0:T(1,128)}', space=vmem, size = 0x12000, scoped, tag = 'internal scratch']
  %s0 = inlined_call_operand.vmem [shape: f32[2,4,16,128], index: 0, kind: input, shape index: {}]
  %s1 = inlined_call_operand.vmem [shape: f32[36,128], index: 1, kind: input, shape index: {}]
  %s2 = inlined_call_operand.vmem [shape: f32[1,128], index: 2, kind: input, shape index: {}]
  %s3 = inlined_call_operand.vmem [shape: f32[16,128], index: 3, kind: input, shape index: {}]
  %s4 = inlined_call_operand.vmem [shape: f32[2,16,128], index: 4, kind: output, shape index: {}]
  %s5 = sld [smem:[#allocation0]]
  $region49: #{fwd.1} parent=0
    _
  %s7 = ssub.s32 1, %s5
  %s8 = scalar_select 0, %s7, %s5
  loop: start=0, step=1, limit=4
  $region2: #{fwd.1} parent=0 // loop_pre_header
    _
  $region3: #{fwd.1} parent=0 // loop_header
    %s10 = sphi 0, %s14
    %p11 = scmp.ge.s32.totalorder %s10, 4
    %s20 = sphi 0, %s22
    %s23 = sphi 0, %s20
    %s24 = sphi 0, %s23
    %s40 = sphi 0, %s24
    %s44 = sphi 0, %s44
    %s46 = sphi 0, %s44
    %s47 = sphi 0, %s46
    %s61 = sphi 0, %s47
    %s65 = sphi 0, %s65
    %s67 = sphi 0, %s65
    %s68 = sphi 0, %s67
    %s82 = sphi 0, %s68
    %s86 = sphi 0, %s86
    %s88 = sphi 0, %s86
    %s89 = sphi 0, %s88
    %s103 = sphi 0, %s89
    %s109 = sphi 0, %s111
    %s112 = sphi 0, %s109
    %s113 = sphi 0, %s112
    %s129 = sphi 0, %s113
  $region4: #{fwd.1} parent=0 // loop_header_branch
    %13 = sbr.rel (%p11) target = $region8
  $region5: #{fwd.1} parent=0 // loop_body
    %s15 = ssub.s32 %s10, 1
    %s16 = ssub.s32 %s10, 2
    %s17 = sadd.s32 %s10, 1
    %s18 = ssub.s32 %s10, %s17
    %p19 = scmp.eq.s32.totalorder %s18, 0
    %s21 = sadd.s32 %s20, 1
    %s22 = scalar_select %p19, %s20, %s21
    %p25 = pneg %p19
    %p26 = scmp.eq.s32.totalorder %s10, 1
    %p27 = por %p25, %p26
    %p28 = scmp.ne.s32.totalorder %s20, %s23
    %p29 = scmp.eq.s32.totalorder %s10, 0
    %p30 = por %p28, %p29
    %p31 = scmp.ne.s32.totalorder %s20, %s23
    %p32 = scmp.eq.s32.totalorder %s15, 1
    %p33 = por %p31, %p32
    %p34 = scmp.ne.s32.totalorder %s23, %s24
    %p35 = scmp.eq.s32.totalorder %s15, 0
    %p36 = por %p34, %p35
    %p37 = scmp.ne.s32.totalorder %s23, %s24
    %p38 = scmp.eq.s32.totalorder %s16, 1
    %p39 = por %p37, %p38
    %p41 = scmp.ne.s32.totalorder %s24, %s40
    %p42 = scmp.eq.s32.totalorder %s16, 0
    %p43 = por %p41, %p42
    %s45 = sadd.s32 %s44, 1
    %p48 = scmp.eq.s32.totalorder %s10, 1
    %p49 = scmp.ne.s32.totalorder %s44, %s46
    %p50 = scmp.eq.s32.totalorder %s10, 0
    %p51 = por %p49, %p50
    %p52 = scmp.ne.s32.totalorder %s44, %s46
    %p53 = scmp.eq.s32.totalorder %s15, 1
    %p54 = por %p52, %p53
    %p55 = scmp.ne.s32.totalorder %s46, %s47
    %p56 = scmp.eq.s32.totalorder %s15, 0
    %p57 = por %p55, %p56
    %p58 = scmp.ne.s32.totalorder %s46, %s47
    %p59 = scmp.eq.s32.totalorder %s16, 1
    %p60 = por %p58, %p59
    %p62 = scmp.ne.s32.totalorder %s47, %s61
    %p63 = scmp.eq.s32.totalorder %s16, 0
    %p64 = por %p62, %p63
    %s66 = sadd.s32 %s65, 1
    %p69 = scmp.eq.s32.totalorder %s10, 1
    %p70 = scmp.ne.s32.totalorder %s65, %s67
    %p71 = scmp.eq.s32.totalorder %s10, 0
    %p72 = por %p70, %p71
    %p73 = scmp.ne.s32.totalorder %s65, %s67
    %p74 = scmp.eq.s32.totalorder %s15, 1
    %p75 = por %p73, %p74
    %p76 = scmp.ne.s32.totalorder %s67, %s68
    %p77 = scmp.eq.s32.totalorder %s15, 0
    %p78 = por %p76, %p77
    %p79 = scmp.ne.s32.totalorder %s67, %s68
    %p80 = scmp.eq.s32.totalorder %s16, 1
    %p81 = por %p79, %p80
    %p83 = scmp.ne.s32.totalorder %s68, %s82
    %p84 = scmp.eq.s32.totalorder %s16, 0
    %p85 = por %p83, %p84
    %s87 = sadd.s32 %s86, 1
    %p90 = scmp.eq.s32.totalorder %s10, 1
    %p91 = scmp.ne.s32.totalorder %s86, %s88
    %p92 = scmp.eq.s32.totalorder %s10, 0
    %p93 = por %p91, %p92
    %p94 = scmp.ne.s32.totalorder %s86, %s88
    %p95 = scmp.eq.s32.totalorder %s15, 1
    %p96 = por %p94, %p95
    %p97 = scmp.ne.s32.totalorder %s88, %s89
    %p98 = scmp.eq.s32.totalorder %s15, 0
    %p99 = por %p97, %p98
    %p100 = scmp.ne.s32.totalorder %s88, %s89
    %p101 = scmp.eq.s32.totalorder %s16, 1
    %p102 = por %p100, %p101
    %p104 = scmp.ne.s32.totalorder %s89, %s103
    %p105 = scmp.eq.s32.totalorder %s16, 0
    %p106 = por %p104, %p105
    %s107 = ssub.s32 %s10, %s17
    %p108 = scmp.eq.s32.totalorder %s107, 0
    %s110 = sadd.s32 %s109, 1
    %s111 = scalar_select %p108, %s109, %s110
    %p114 = pneg %p108
    %p115 = scmp.eq.s32.totalorder %s10, 1
    %p116 = por %p114, %p115
    %p117 = scmp.ne.s32.totalorder %s109, %s112
    %p118 = scmp.eq.s32.totalorder %s10, 0
    %p119 = por %p117, %p118
    %p120 = scmp.ne.s32.totalorder %s109, %s112
    %p121 = scmp.eq.s32.totalorder %s15, 1
    %p122 = por %p120, %p121
    %p123 = scmp.ne.s32.totalorder %s112, %s113
    %p124 = scmp.eq.s32.totalorder %s15, 0
    %p125 = por %p123, %p124
    %p126 = scmp.ne.s32.totalorder %s112, %s113
    %p127 = scmp.eq.s32.totalorder %s16, 1
    %p128 = por %p126, %p127
    %p130 = scmp.ne.s32.totalorder %s113, %s129
    %p131 = scmp.eq.s32.totalorder %s16, 0
    %p132 = por %p130, %p131
    %p133 = scmp.le.s32.totalorder 1, %s10
    %p134 = scmp.lt.s32.totalorder %s10, 3
    %p135 = pnand %p133, %p134
    %p136 = pneg %p135
    // Predicated region
    $region9: #{fwd.1} parent=5 // pred_check
      _
    $region10: #{fwd.1} parent=5 // pred_check_branch
      %138 = sbr.rel (%p135) target = $region12
    $region11: #{fwd.1} parent=5 // pred_region
      %s139 = ssub.s32 %s10, 1
      // Predicated region
      $region13: #{fwd.1} parent=11 // pred_check
        %p140 = pneg %p57
      $region14: #{fwd.1} parent=11 // pred_check_branch
        %142 = sbr.rel (%p140) target = $region16
      $region15: #{fwd.1} parent=11 // pred_region
        _
      $region16: #{fwd.1} parent=11 // pred_fallthru
        _
      // Predicated region
      $region17: #{fwd.1} parent=11 // pred_check
        %p143 = pneg %p78
      $region18: #{fwd.1} parent=11 // pred_check_branch
        %145 = sbr.rel (%p143) target = $region20
      $region19: #{fwd.1} parent=11 // pred_region
        _
      $region20: #{fwd.1} parent=11 // pred_fallthru
        _
      // Predicated region
      $region21: #{fwd.1} parent=11 // pred_check
        %p146 = pneg %p99
      $region22: #{fwd.1} parent=11 // pred_check_branch
        %148 = sbr.rel (%p146) target = $region24
      $region23: #{fwd.1} parent=11 // pred_region
        _
      $region24: #{fwd.1} parent=11 // pred_fallthru
        _
    $region12: #{fwd.1} parent=5 // pred_fallthru
      _
    %p149 = scmp.lt.s32.totalorder %s10, 2
    // Predicated region
    $region25: #{fwd.1} parent=5 // pred_check
      %p150 = pneg %p149
    $region26: #{fwd.1} parent=5 // pred_check_branch
      %152 = sbr.rel (%p150) target = $region28
    $region27: #{fwd.1} parent=5 // pred_region
      // Predicated region
      $region29: #{fwd.1} parent=27 // pred_check
        %p153 = pneg %p30
      $region30: #{fwd.1} parent=27 // pred_check_branch
        %155 = sbr.rel (%p153) target = $region32
      $region31: #{fwd.1} parent=27 // pred_region
        %p156 = scmp.lt.s32.totalorder %s10, 1
        %s157 = scalar_select %p156, %s10, 1
        %s158 = smul.addr %s157, 8
        %s159 = smul.addr %s158, 8
        %s160 = scalar_lea.vmem %s0, %s159
      $region32: #{fwd.1} parent=27 // pred_fallthru
        _
    $region28: #{fwd.1} parent=5 // pred_fallthru
      _
    %p161 = scmp.le.s32.totalorder 1, %s10
    %p162 = scmp.lt.s32.totalorder %s10, 3
    %p163 = pnand %p161, %p162
    %p164 = pneg %p163
    // Predicated region
    $region33: #{fwd.1} parent=5 // pred_check
      _
    $region34: #{fwd.1} parent=5 // pred_check_branch
      %166 = sbr.rel (%p163) target = $region36
    $region35: #{fwd.1} parent=5 // pred_region
      %s167 = ssub.s32 %s10, 1
      %p168 = scmp.lt.s32.totalorder %s15, 1
      %s169 = scalar_select %p168, %s15, 1
      %s170 = smul.addr %s169, 8
      %s171 = smul.addr %s170, 8
      %s172 = scalar_lea.vmem %s0, %s171
      %p173 = pneg %p36
      %p174 = pneg %p33
      %p175 = pneg %p57
      %p176 = pneg %p54
      %p177 = pneg %p78
      %p178 = pneg %p75
      %p179 = pneg %p99
      %p180 = pneg %p96
      %p181 = pneg %p125
      %p182 = pneg %p122
      %p183 = scmp.lt.s32.totalorder %s15, 1
      %s184 = scalar_select %p183, %s15, 1
      %s185 = smul.addr %s184, 2
      %s186 = smul.addr %s185, 8
      %s187 = scalar_lea.vmem %s4, %s186
      %p188 = scmp.lt.s32.totalorder %s15, 1
      %s189 = scalar_select %p188, %s15, 1
      %s190 = smul.addr %s189, 8
      %s191 = smul.addr %s190, 8
      %s192 = scalar_lea.vmem %s0, %s191
      %p193 = scmp.lt.s32.totalorder %s15, 1
      %s194 = scalar_select %p193, %s15, 1
      %s195 = smul.addr %s194, 2
      %s196 = smul.addr %s195, 8
      %s197 = scalar_lea.vmem %s4, %s196
      %v198 = vld [vmem:[%s192] sm:$0xff]
      %v199 = vld [vmem:[%s192 + $0x8] sm:$0xff]
      %v200 = vld [vmem:[%s1] sm:$0x1]
      %v201 = vlaneseq
      %v202 = vshrl.u32 %v201, 7
      %v203 = vsub.s32 0, %v202
      %v204 = vrot.slane %v200, %v203
      %v205 = vmul.f32 %v204, %v198
      %v206 = vmul.f32 %v204, %v199
      %207 = vrot.lane.b32.xlu0 %v198, 127
      %v208 = vpop.permute.xlu0 %207
      %209 = vrot.lane.b32.xlu0 %v199, 127
      %v210 = vpop.permute.xlu0 %209
      %v211 = vld [vmem:[%s1 + $0x1] sm:$0x1]
      %v212 = vlaneseq
      %v213 = vshrl.u32 %v212, 7
      %v214 = vsub.s32 0, %v213
      %v215 = vrot.slane %v211, %v214
      %v216 = vmul.f32 %v215, %v208
      %v217 = vmul.f32 %v215, %v210
      %218 = vrot.lane.b32.xlu0 %v198, 126
      %v219 = vpop.permute.xlu0 %218
      %220 = vrot.lane.b32.xlu0 %v199, 126
      %v221 = vpop.permute.xlu0 %220
      %v222 = vld [vmem:[%s1 + $0x2] sm:$0x1]
      %v223 = vlaneseq
      %v224 = vshrl.u32 %v223, 7
      %v225 = vsub.s32 0, %v224
      %v226 = vrot.slane %v222, %v225
      %v227 = vmul.f32 %v226, %v219
      %v228 = vmul.f32 %v226, %v221
      %v229 = vrot.slane %v198, 1
      %v230 = vrot.slane %v199, 1
      %v231 = vlaneseq
      %v232 = vshrl.u32 %v231, 7
      %vm233 = vcmp.lt.s32.totalorder %v232, 7
      %v234 = vsel %vm233, %v229, %v230
      %v235 = vsel %vm233, %v230, %v229
      %v236 = vld [vmem:[%s1 + $0x3] sm:$0x1]
      %v237 = vlaneseq
      %v238 = vshrl.u32 %v237, 7
      %v239 = vsub.s32 0, %v238
      %v240 = vrot.slane %v236, %v239
      %v241 = vmul.f32 %v240, %v234
      %v242 = vmul.f32 %v240, %v235
      %243 = vrot.lane.b32.xlu0 %v234, 127
      %v244 = vpop.permute.xlu0 %243
      %245 = vrot.lane.b32.xlu0 %v235, 127
      %v246 = vpop.permute.xlu0 %245
      %v247 = vld [vmem:[%s1 + $0x4] sm:$0x1]
      %v248 = vlaneseq
      %v249 = vshrl.u32 %v248, 7
      %v250 = vsub.s32 0, %v249
      %v251 = vrot.slane %v247, %v250
      %v252 = vmul.f32 %v251, %v244
      %v253 = vmul.f32 %v251, %v246
      %v254 = vadd.f32 %v205, %v252
      %v255 = vadd.f32 %v206, %v253
      %256 = vrot.lane.b32.xlu0 %v234, 126
      %v257 = vpop.permute.xlu0 %256
      %258 = vrot.lane.b32.xlu0 %v235, 126
      %v259 = vpop.permute.xlu0 %258
      %v260 = vld [vmem:[%s1 + $0x5] sm:$0x1]
      %v261 = vlaneseq
      %v262 = vshrl.u32 %v261, 7
      %v263 = vsub.s32 0, %v262
      %v264 = vrot.slane %v260, %v263
      %v265 = vmul.f32 %v264, %v257
      %v266 = vmul.f32 %v264, %v259
      %v267 = vadd.f32 %v216, %v265
      %v268 = vadd.f32 %v217, %v266
      %v269 = vrot.slane %v198, 2
      %v270 = vrot.slane %v199, 2
      %vm271 = vcmp.lt.s32.totalorder %v232, 6
      %v272 = vsel %vm271, %v269, %v270
      %v273 = vsel %vm271, %v270, %v269
      %v274 = vld [vmem:[%s1 + $0x6] sm:$0x1]
      %v275 = vlaneseq
      %v276 = vshrl.u32 %v275, 7
      %v277 = vsub.s32 0, %v276
      %v278 = vrot.slane %v274, %v277
      %v279 = vmul.f32 %v278, %v272
      %v280 = vmul.f32 %v278, %v273
      %v281 = vadd.f32 %v227, %v279
      %v282 = vadd.f32 %v228, %v280
      %283 = vrot.lane.b32.xlu0 %v272, 127
      %v284 = vpop.permute.xlu0 %283
      %285 = vrot.lane.b32.xlu0 %v273, 127
      %v286 = vpop.permute.xlu0 %285
      %v287 = vld [vmem:[%s1 + $0x7] sm:$0x1]
      %v288 = vlaneseq
      %v289 = vshrl.u32 %v288, 7
      %v290 = vsub.s32 0, %v289
      %v291 = vrot.slane %v287, %v290
      %v292 = vmul.f32 %v291, %v284
      %v293 = vmul.f32 %v291, %v286
      %v294 = vadd.f32 %v241, %v292
      %v295 = vadd.f32 %v242, %v293
      %296 = vrot.lane.b32.xlu0 %v272, 126
      %v297 = vpop.permute.xlu0 %296
      %298 = vrot.lane.b32.xlu0 %v273, 126
      %v299 = vpop.permute.xlu0 %298
      %v300 = vld [vmem:[%s1 + $0x8] sm:$0x1]
      %v301 = vlaneseq
      %v302 = vshrl.u32 %v301, 7
      %v303 = vsub.s32 0, %v302
      %v304 = vrot.slane %v300, %v303
      %v305 = vmul.f32 %v304, %v297
      %v306 = vmul.f32 %v304, %v299
      %v307 = vadd.f32 %v254, %v305
      %v308 = vadd.f32 %v255, %v306
      %s309 = scalar_lea.vmem %s192, 16
      %v310 = vld [vmem:[%s309] sm:$0xff]
      %v311 = vld [vmem:[%s309 + $0x8] sm:$0xff]
      %v312 = vld [vmem:[%s1 + $0x9] sm:$0x1]
      %v313 = vlaneseq
      %v314 = vshrl.u32 %v313, 7
      %v315 = vsub.s32 0, %v314
      %v316 = vrot.slane %v312, %v315
      %v317 = vmul.f32 %v316, %v310
      %v318 = vmul.f32 %v316, %v311
      %v319 = vadd.f32 %v267, %v317
      %v320 = vadd.f32 %v268, %v318
      %321 = vrot.lane.b32.xlu0 %v310, 127
      %v322 = vpop.permute.xlu0 %321
      %323 = vrot.lane.b32.xlu0 %v311, 127
      %v324 = vpop.permute.xlu0 %323
      %v325 = vld [vmem:[%s1 + $0xa] sm:$0x1]
      %v326 = vlaneseq
      %v327 = vshrl.u32 %v326, 7
      %v328 = vsub.s32 0, %v327
      %v329 = vrot.slane %v325, %v328
      %v330 = vmul.f32 %v329, %v322
      %v331 = vmul.f32 %v329, %v324
      %v332 = vadd.f32 %v281, %v330
      %v333 = vadd.f32 %v282, %v331
      %334 = vrot.lane.b32.xlu0 %v310, 126
      %v335 = vpop.permute.xlu0 %334
      %336 = vrot.lane.b32.xlu0 %v311, 126
      %v337 = vpop.permute.xlu0 %336
      %v338 = vld [vmem:[%s1 + $0xb] sm:$0x1]
      %v339 = vlaneseq
      %v340 = vshrl.u32 %v339, 7
      %v341 = vsub.s32 0, %v340
      %v342 = vrot.slane %v338, %v341
      %v343 = vmul.f32 %v342, %v335
      %v344 = vmul.f32 %v342, %v337
      %v345 = vadd.f32 %v294, %v343
      %v346 = vadd.f32 %v295, %v344
      %v347 = vrot.slane %v310, 1
      %v348 = vrot.slane %v311, 1
      %v349 = vsel %vm233, %v347, %v348
      %v350 = vsel %vm233, %v348, %v347
      %v351 = vld [vmem:[%s1 + $0xc] sm:$0x1]
      %v352 = vlaneseq
      %v353 = vshrl.u32 %v352, 7
      %v354 = vsub.s32 0, %v353
      %v355 = vrot.slane %v351, %v354
      %v356 = vmul.f32 %v355, %v349
      %v357 = vmul.f32 %v355, %v350
      %v358 = vadd.f32 %v307, %v356
      %v359 = vadd.f32 %v308, %v357
      %360 = vrot.lane.b32.xlu0 %v349, 127
      %v361 = vpop.permute.xlu0 %360
      %362 = vrot.lane.b32.xlu0 %v350, 127
      %v363 = vpop.permute.xlu0 %362
      %v364 = vld [vmem:[%s1 + $0xd] sm:$0x1]
      %v365 = vlaneseq
      %v366 = vshrl.u32 %v365, 7
      %v367 = vsub.s32 0, %v366
      %v368 = vrot.slane %v364, %v367
      %v369 = vmul.f32 %v368, %v361
      %v370 = vmul.f32 %v368, %v363
      %v371 = vadd.f32 %v319, %v369
      %v372 = vadd.f32 %v320, %v370
      %373 = vrot.lane.b32.xlu0 %v349, 126
      %v374 = vpop.permute.xlu0 %373
      %375 = vrot.lane.b32.xlu0 %v350, 126
      %v376 = vpop.permute.xlu0 %375
      %v377 = vld [vmem:[%s1 + $0xe] sm:$0x1]
      %v378 = vlaneseq
      %v379 = vshrl.u32 %v378, 7
      %v380 = vsub.s32 0, %v379
      %v381 = vrot.slane %v377, %v380
      %v382 = vmul.f32 %v381, %v374
      %v383 = vmul.f32 %v381, %v376
      %v384 = vadd.f32 %v332, %v382
      %v385 = vadd.f32 %v333, %v383
      %v386 = vrot.slane %v310, 2
      %v387 = vrot.slane %v311, 2
      %v388 = vsel %vm271, %v386, %v387
      %v389 = vsel %vm271, %v387, %v386
      %v390 = vld [vmem:[%s1 + $0xf] sm:$0x1]
      %v391 = vlaneseq
      %v392 = vshrl.u32 %v391, 7
      %v393 = vsub.s32 0, %v392
      %v394 = vrot.slane %v390, %v393
      %v395 = vmul.f32 %v394, %v388
      %v396 = vmul.f32 %v394, %v389
      %v397 = vadd.f32 %v345, %v395
      %v398 = vadd.f32 %v346, %v396
      %399 = vrot.lane.b32.xlu0 %v388, 127
      %v400 = vpop.permute.xlu0 %399
      %401 = vrot.lane.b32.xlu0 %v389, 127
      %v402 = vpop.permute.xlu0 %401
      %v403 = vld [vmem:[%s1 + $0x10] sm:$0x1]
      %v404 = vlaneseq
      %v405 = vshrl.u32 %v404, 7
      %v406 = vsub.s32 0, %v405
      %v407 = vrot.slane %v403, %v406
      %v408 = vmul.f32 %v407, %v400
      %v409 = vmul.f32 %v407, %v402
      %v410 = vadd.f32 %v358, %v408
      %v411 = vadd.f32 %v359, %v409
      %412 = vrot.lane.b32.xlu0 %v388, 126
      %v413 = vpop.permute.xlu0 %412
      %414 = vrot.lane.b32.xlu0 %v389, 126
      %v415 = vpop.permute.xlu0 %414
      %v416 = vld [vmem:[%s1 + $0x11] sm:$0x1]
      %v417 = vlaneseq
      %v418 = vshrl.u32 %v417, 7
      %v419 = vsub.s32 0, %v418
      %v420 = vrot.slane %v416, %v419
      %v421 = vmul.f32 %v420, %v413
      %v422 = vmul.f32 %v420, %v415
      %v423 = vadd.f32 %v371, %v421
      %v424 = vadd.f32 %v372, %v422
      %s425 = scalar_lea.vmem %s192, 32
      %v426 = vld [vmem:[%s425] sm:$0xff]
      %v427 = vld [vmem:[%s425 + $0x8] sm:$0xff]
      %v428 = vld [vmem:[%s1 + $0x12] sm:$0x1]
      %v429 = vlaneseq
      %v430 = vshrl.u32 %v429, 7
      %v431 = vsub.s32 0, %v430
      %v432 = vrot.slane %v428, %v431
      %v433 = vmul.f32 %v432, %v426
      %v434 = vmul.f32 %v432, %v427
      %v435 = vadd.f32 %v384, %v433
      %v436 = vadd.f32 %v385, %v434
      %437 = vrot.lane.b32.xlu0 %v426, 127
      %v438 = vpop.permute.xlu0 %437
      %439 = vrot.lane.b32.xlu0 %v427, 127
      %v440 = vpop.permute.xlu0 %439
      %v441 = vld [vmem:[%s1 + $0x13] sm:$0x1]
      %v442 = vlaneseq
      %v443 = vshrl.u32 %v442, 7
      %v444 = vsub.s32 0, %v443
      %v445 = vrot.slane %v441, %v444
      %v446 = vmul.f32 %v445, %v438
      %v447 = vmul.f32 %v445, %v440
      %v448 = vadd.f32 %v397, %v446
      %v449 = vadd.f32 %v398, %v447
      %450 = vrot.lane.b32.xlu0 %v426, 126
      %v451 = vpop.permute.xlu0 %450
      %452 = vrot.lane.b32.xlu0 %v427, 126
      %v453 = vpop.permute.xlu0 %452
      %v454 = vld [vmem:[%s1 + $0x14] sm:$0x1]
      %v455 = vlaneseq
      %v456 = vshrl.u32 %v455, 7
      %v457 = vsub.s32 0, %v456
      %v458 = vrot.slane %v454, %v457
      %v459 = vmul.f32 %v458, %v451
      %v460 = vmul.f32 %v458, %v453
      %v461 = vadd.f32 %v410, %v459
      %v462 = vadd.f32 %v411, %v460
      %v463 = vrot.slane %v426, 1
      %v464 = vrot.slane %v427, 1
      %v465 = vsel %vm233, %v463, %v464
      %v466 = vsel %vm233, %v464, %v463
      %v467 = vld [vmem:[%s1 + $0x15] sm:$0x1]
      %v468 = vlaneseq
      %v469 = vshrl.u32 %v468, 7
      %v470 = vsub.s32 0, %v469
      %v471 = vrot.slane %v467, %v470
      %v472 = vmul.f32 %v471, %v465
      %v473 = vmul.f32 %v471, %v466
      %v474 = vadd.f32 %v423, %v472
      %v475 = vadd.f32 %v424, %v473
      %476 = vrot.lane.b32.xlu0 %v465, 127
      %v477 = vpop.permute.xlu0 %476
      %478 = vrot.lane.b32.xlu0 %v466, 127
      %v479 = vpop.permute.xlu0 %478
      %v480 = vld [vmem:[%s1 + $0x16] sm:$0x1]
      %v481 = vlaneseq
      %v482 = vshrl.u32 %v481, 7
      %v483 = vsub.s32 0, %v482
      %v484 = vrot.slane %v480, %v483
      %v485 = vmul.f32 %v484, %v477
      %v486 = vmul.f32 %v484, %v479
      %v487 = vadd.f32 %v435, %v485
      %v488 = vadd.f32 %v436, %v486
      %489 = vrot.lane.b32.xlu0 %v465, 126
      %v490 = vpop.permute.xlu0 %489
      %491 = vrot.lane.b32.xlu0 %v466, 126
      %v492 = vpop.permute.xlu0 %491
      %v493 = vld [vmem:[%s1 + $0x17] sm:$0x1]
      %v494 = vlaneseq
      %v495 = vshrl.u32 %v494, 7
      %v496 = vsub.s32 0, %v495
      %v497 = vrot.slane %v493, %v496
      %v498 = vmul.f32 %v497, %v490
      %v499 = vmul.f32 %v497, %v492
      %v500 = vadd.f32 %v448, %v498
      %v501 = vadd.f32 %v449, %v499
      %v502 = vrot.slane %v426, 2
      %v503 = vrot.slane %v427, 2
      %v504 = vsel %vm271, %v502, %v503
      %v505 = vsel %vm271, %v503, %v502
      %v506 = vld [vmem:[%s1 + $0x18] sm:$0x1]
      %v507 = vlaneseq
      %v508 = vshrl.u32 %v507, 7
      %v509 = vsub.s32 0, %v508
      %v510 = vrot.slane %v506, %v509
      %v511 = vmul.f32 %v510, %v504
      %v512 = vmul.f32 %v510, %v505
      %v513 = vadd.f32 %v461, %v511
      %v514 = vadd.f32 %v462, %v512
      %515 = vrot.lane.b32.xlu0 %v504, 127
      %v516 = vpop.permute.xlu0 %515
      %517 = vrot.lane.b32.xlu0 %v505, 127
      %v518 = vpop.permute.xlu0 %517
      %v519 = vld [vmem:[%s1 + $0x19] sm:$0x1]
      %v520 = vlaneseq
      %v521 = vshrl.u32 %v520, 7
      %v522 = vsub.s32 0, %v521
      %v523 = vrot.slane %v519, %v522
      %v524 = vmul.f32 %v523, %v516
      %v525 = vmul.f32 %v523, %v518
      %v526 = vadd.f32 %v474, %v524
      %v527 = vadd.f32 %v475, %v525
      %528 = vrot.lane.b32.xlu0 %v504, 126
      %v529 = vpop.permute.xlu0 %528
      %530 = vrot.lane.b32.xlu0 %v505, 126
      %v531 = vpop.permute.xlu0 %530
      %v532 = vld [vmem:[%s1 + $0x1a] sm:$0x1]
      %v533 = vlaneseq
      %v534 = vshrl.u32 %v533, 7
      %v535 = vsub.s32 0, %v534
      %v536 = vrot.slane %v532, %v535
      %v537 = vmul.f32 %v536, %v529
      %v538 = vmul.f32 %v536, %v531
      %v539 = vadd.f32 %v487, %v537
      %v540 = vadd.f32 %v488, %v538
      %s541 = scalar_lea.vmem %s192, 48
      %v542 = vld [vmem:[%s541] sm:$0xff]
      %v543 = vld [vmem:[%s541 + $0x8] sm:$0xff]
      %v544 = vld [vmem:[%s1 + $0x1b] sm:$0x1]
      %v545 = vlaneseq
      %v546 = vshrl.u32 %v545, 7
      %v547 = vsub.s32 0, %v546
      %v548 = vrot.slane %v544, %v547
      %v549 = vmul.f32 %v548, %v542
      %v550 = vmul.f32 %v548, %v543
      %v551 = vadd.f32 %v500, %v549
      %v552 = vadd.f32 %v501, %v550
      %553 = vrot.lane.b32.xlu0 %v542, 127
      %v554 = vpop.permute.xlu0 %553
      %555 = vrot.lane.b32.xlu0 %v543, 127
      %v556 = vpop.permute.xlu0 %555
      %v557 = vld [vmem:[%s1 + $0x1c] sm:$0x1]
      %v558 = vlaneseq
      %v559 = vshrl.u32 %v558, 7
      %v560 = vsub.s32 0, %v559
      %v561 = vrot.slane %v557, %v560
      %v562 = vmul.f32 %v561, %v554
      %v563 = vmul.f32 %v561, %v556
      %v564 = vadd.f32 %v513, %v562
      %v565 = vadd.f32 %v514, %v563
      %566 = vrot.lane.b32.xlu0 %v542, 126
      %v567 = vpop.permute.xlu0 %566
      %568 = vrot.lane.b32.xlu0 %v543, 126
      %v569 = vpop.permute.xlu0 %568
      %v570 = vld [vmem:[%s1 + $0x1d] sm:$0x1]
      %v571 = vlaneseq
      %v572 = vshrl.u32 %v571, 7
      %v573 = vsub.s32 0, %v572
      %v574 = vrot.slane %v570, %v573
      %v575 = vmul.f32 %v574, %v567
      %v576 = vmul.f32 %v574, %v569
      %v577 = vadd.f32 %v526, %v575
      %v578 = vadd.f32 %v527, %v576
      %v579 = vrot.slane %v542, 1
      %v580 = vrot.slane %v543, 1
      %v581 = vsel %vm233, %v579, %v580
      %v582 = vsel %vm233, %v580, %v579
      %v583 = vld [vmem:[%s1 + $0x1e] sm:$0x1]
      %v584 = vlaneseq
      %v585 = vshrl.u32 %v584, 7
      %v586 = vsub.s32 0, %v585
      %v587 = vrot.slane %v583, %v586
      %v588 = vmul.f32 %v587, %v581
      %v589 = vmul.f32 %v587, %v582
      %v590 = vadd.f32 %v539, %v588
      %v591 = vadd.f32 %v540, %v589
      %592 = vrot.lane.b32.xlu0 %v581, 127
      %v593 = vpop.permute.xlu0 %592
      %594 = vrot.lane.b32.xlu0 %v582, 127
      %v595 = vpop.permute.xlu0 %594
      %v596 = vld [vmem:[%s1 + $0x1f] sm:$0x1]
      %v597 = vlaneseq
      %v598 = vshrl.u32 %v597, 7
      %v599 = vsub.s32 0, %v598
      %v600 = vrot.slane %v596, %v599
      %v601 = vmul.f32 %v600, %v593
      %v602 = vmul.f32 %v600, %v595
      %v603 = vadd.f32 %v551, %v601
      %v604 = vadd.f32 %v552, %v602
      %605 = vrot.lane.b32.xlu0 %v581, 126
      %v606 = vpop.permute.xlu0 %605
      %607 = vrot.lane.b32.xlu0 %v582, 126
      %v608 = vpop.permute.xlu0 %607
      %v609 = vld [vmem:[%s1 + $0x20] sm:$0x1]
      %v610 = vlaneseq
      %v611 = vshrl.u32 %v610, 7
      %v612 = vsub.s32 0, %v611
      %v613 = vrot.slane %v609, %v612
      %v614 = vmul.f32 %v613, %v606
      %v615 = vmul.f32 %v613, %v608
      %v616 = vadd.f32 %v564, %v614
      %v617 = vadd.f32 %v565, %v615
      %v618 = vrot.slane %v542, 2
      %v619 = vrot.slane %v543, 2
      %v620 = vsel %vm271, %v618, %v619
      %v621 = vsel %vm271, %v619, %v618
      %v622 = vld [vmem:[%s1 + $0x21] sm:$0x1]
      %v623 = vlaneseq
      %v624 = vshrl.u32 %v623, 7
      %v625 = vsub.s32 0, %v624
      %v626 = vrot.slane %v622, %v625
      %v627 = vmul.f32 %v626, %v620
      %v628 = vmul.f32 %v626, %v621
      %v629 = vadd.f32 %v577, %v627
      %v630 = vadd.f32 %v578, %v628
      %631 = vrot.lane.b32.xlu0 %v620, 127
      %v632 = vpop.permute.xlu0 %631
      %633 = vrot.lane.b32.xlu0 %v621, 127
      %v634 = vpop.permute.xlu0 %633
      %v635 = vld [vmem:[%s1 + $0x22] sm:$0x1]
      %v636 = vlaneseq
      %v637 = vshrl.u32 %v636, 7
      %v638 = vsub.s32 0, %v637
      %v639 = vrot.slane %v635, %v638
      %v640 = vmul.f32 %v639, %v632
      %v641 = vmul.f32 %v639, %v634
      %v642 = vadd.f32 %v590, %v640
      %v643 = vadd.f32 %v591, %v641
      %644 = vrot.lane.b32.xlu0 %v620, 126
      %v645 = vpop.permute.xlu0 %644
      %646 = vrot.lane.b32.xlu0 %v621, 126
      %v647 = vpop.permute.xlu0 %646
      %v648 = vld [vmem:[%s1 + $0x23] sm:$0x1]
      %v649 = vlaneseq
      %v650 = vshrl.u32 %v649, 7
      %v651 = vsub.s32 0, %v650
      %v652 = vrot.slane %v648, %v651
      %v653 = vmul.f32 %v652, %v645
      %v654 = vmul.f32 %v652, %v647
      %v655 = vadd.f32 %v603, %v653
      %v656 = vadd.f32 %v604, %v654
      %v657 = vadd.f32 %v616, %v629
      %v658 = vadd.f32 %v617, %v630
      %v659 = vadd.f32 %v642, %v655
      %v660 = vadd.f32 %v643, %v656
      %v661 = vadd.f32 %v657, %v659
      %v662 = vadd.f32 %v658, %v660
      %v663 = vrot.slane %v661, 7
      %v664 = vrot.slane %v662, 7
      %vm665 = vcmp.lt.s32.totalorder %v232, 1
      %v666 = vsel %vm665, %v663, %v664
      %v667 = vsel %vm665, %v664, %v663
      %668 = vrot.lane.b32.xlu0 %v667, 1
      %v669 = vpop.permute.xlu0 %668
      %670 = vrot.lane.b32.xlu0 %v666, 1
      %v671 = vpop.permute.xlu0 %670
      %v672 = vld [vmem:[%s3] sm:$0xff]
      %v673 = vld [vmem:[%s3 + $0x8] sm:$0xff]
      %v674 = vld [vmem:[%s2] sm:$0x1]
      %v676 = vlaneseq
      %v677 = vshrl.u32 %v676, 7
      %v678 = vsub.s32 0, %v677
      %v679 = vrot.slane %v674, %v678
      %v681 = vadd.f32 %v669, %v679
      %v682 = vadd.f32 %v671, %v679
      %v683 = vmax.f32 %v681, 0.0
      %v684 = vmax.f32 %v682, 0.0
      %v685 = vmul.f32 %v672, %v683
      %v686 = vmul.f32 %v673, %v684
      %687 = vrot.lane.b32.xlu0 %v685, 127
      %v688 = vpop.permute.xlu0 %687
      %689 = vrot.lane.b32.xlu0 %v686, 127
      %v690 = vpop.permute.xlu0 %689
      %v691 = vmax.f32 %v685, %v688
      %v692 = vmax.f32 %v686, %v690
      %v693 = vrot.slane %v691, 1
      %v694 = vrot.slane %v692, 1
      %v695 = vsel %vm233, %v693, %v694
      %v696 = vsel %vm233, %v694, %v693
      %v697 = vmax.f32 %v691, %v695
      %v698 = vmax.f32 %v692, %v696
      %699 = vst [vmem:[%s197] sm:$0xff] %v697
      %700 = vst [vmem:[%s197 + $0x8] sm:$0xff] %v698
      %p701 = scmp.lt.s32.totalorder %s15, 1
      %s702 = scalar_select %p701, %s15, 1
      %s703 = smul.addr %s702, 2
      %s704 = smul.addr %s703, 8
      %s705 = scalar_lea.vmem %s4, %s704
      // Predicated region
      $region37: #{fwd.1} parent=35 // pred_check
        %p706 = pneg %p122
      $region38: #{fwd.1} parent=35 // pred_check_branch
        %708 = sbr.rel (%p706) target = $region40
      $region39: #{fwd.1} parent=35 // pred_region
        _
      $region40: #{fwd.1} parent=35 // pred_fallthru
        _
    $region36: #{fwd.1} parent=5 // pred_fallthru
      _
    %p709 = scmp.le.s32.totalorder 2, %s10
    // Predicated region
    $region41: #{fwd.1} parent=5 // pred_check
      %p710 = pneg %p709
    $region42: #{fwd.1} parent=5 // pred_check_branch
      %712 = sbr.rel (%p710) target = $region44
    $region43: #{fwd.1} parent=5 // pred_region
      %s713 = ssub.s32 %s10, 2
      // Predicated region
      $region45: #{fwd.1} parent=43 // pred_check
        %p714 = pneg %p128
      $region46: #{fwd.1} parent=43 // pred_check_branch
        %716 = sbr.rel (%p714) target = $region48
      $region47: #{fwd.1} parent=43 // pred_region
        %p717 = scmp.lt.s32.totalorder %s16, 1
        %s718 = scalar_select %p717, %s16, 1
        %s719 = smul.addr %s718, 2
        %s720 = smul.addr %s719, 8
        %s721 = scalar_lea.vmem %s4, %s720
      $region48: #{fwd.1} parent=43 // pred_fallthru
        _
    $region44: #{fwd.1} parent=5 // pred_fallthru
      _
  $region6: #{fwd.1} parent=0 // loop_footer
    %s14 = sadd.s32 1, %s10
  $region7: #{fwd.1} parent=0 // loop_footer_branch
    %9 = sbr.rel target = $region3
  $region8: #{fwd.1} parent=0 // loop_exit
    _

</llo_original>
